<compile_context>
chip_gen: v7x
topology: tpu7x:2x2x1
jax: 0.10.0
libtpu: 0.0.40
codegen_flags: <defaults>
</compile_context>

<pallas_src>
import functools

import jax
import jax.numpy as jnp
from jax import lax
from jax.experimental import pallas as pl
from jax.experimental.pallas import tpu as pltpu


def _layer_norm(x, gamma, beta, eps=1e-5):
    mean = jnp.mean(x, axis=-1, keepdims=True)
    var = jnp.mean((x - mean) ** 2, axis=-1, keepdims=True)
    return (x - mean) * lax.rsqrt(var + eps) * gamma + beta


# --------------------------------------------------------------------------
# Prologue: project Q/K/V once per row, head-major bf16 output, scale folded
# --------------------------------------------------------------------------
def qkv_proj_kernel(x_ref, wq_ref, bq_ref, wk_ref, bk_ref, wv_ref, bv_ref,
                    q_ref, k_ref, v_ref, *, num_heads, scale):
    xb = x_ref[0]                                                     # (ts, D) bf16
    q = jnp.dot(xb, wq_ref[...], preferred_element_type=jnp.float32) + bq_ref[...]
    q = q * scale                                                     # fold 1/sqrt(dh)
    k = jnp.dot(xb, wk_ref[...], preferred_element_type=jnp.float32) + bk_ref[...]
    v = jnp.dot(xb, wv_ref[...], preferred_element_type=jnp.float32) + bv_ref[...]
    dh = q.shape[-1] // num_heads
    for h in range(num_heads):                                        # static slices
        sl = slice(h * dh, (h + 1) * dh)
        q_ref[0, h] = q[:, sl].astype(jnp.bfloat16)
        k_ref[0, h] = k[:, sl].astype(jnp.bfloat16)
        v_ref[0, h] = v[:, sl].astype(jnp.bfloat16)


# --------------------------------------------------------------------------
# Main kernel: flash attention over kv tiles + out-proj + add&norm + FFN + add&norm
# --------------------------------------------------------------------------
def attn_ffn_kernel(xq_ref, q_ref, k_ref, v_ref, mask_ref,
                    wo_ref, bo_ref, g1_ref, be1_ref,
                    w1_ref, bf1_ref, w2_ref, bf2_ref, g2_ref, be2_ref,
                    out_ref,
                    m_scr, l_scr, acc_scr,
                    *, num_heads, ffn_chunk):
    ki = pl.program_id(2)
    nk = pl.num_programs(2)

    tq = q_ref.shape[2]
    tk = k_ref.shape[2]
    dh = q_ref.shape[3]
    d_model = num_heads * dh
    neg_inf = jnp.float32(-1e9)

    # ---- first KV tile for this (batch, q-tile): reset running statistics
    @pl.when(ki == 0)
    def _init():
        m_scr[...] = jnp.full(m_scr.shape, -1e30, jnp.float32)
        l_scr[...] = jnp.zeros(l_scr.shape, jnp.float32)
        acc_scr[...] = jnp.zeros(acc_scr.shape, jnp.float32)

    # mask predicate for this KV tile, hoisted out of the head loop
    keep = mask_ref[...].reshape(1, tk) > 0.0                         # (1, tk)

    # ---- online-softmax update, per head, all running state in VMEM scratch
    # TODO(synk): for num_heads >= 8 switch to lax.fori_loop(..., unroll=2)
    # with pl.ds head slices to bound vreg live ranges.
    for h in range(num_heads):
        qh = q_ref[0, h]                                              # (tq, dh) bf16
        kh = k_ref[0, h]                                              # (tk, dh) bf16
        vh = v_ref[0, h]                                              # (tk, dh) bf16
        # contract dh of both operands: no explicit kh.T (no XLU transpose)
        s = lax.dot_general(qh, kh, (((1,), (1,)), ((), ())),
                            preferred_element_type=jnp.float32)       # (tq, tk)
        s = jnp.where(keep, s, neg_inf)
        m_prev = m_scr[h]                                             # (tq, 1)
        m_new = jnp.maximum(m_prev, jnp.max(s, axis=-1, keepdims=True))
        alpha = jnp.exp(m_prev - m_new)
        p = jnp.exp(s - m_new)
        l_scr[h] = alpha * l_scr[h] + jnp.sum(p, axis=-1, keepdims=True)
        acc_scr[h] = alpha * acc_scr[h] + jnp.dot(
            p.astype(jnp.bfloat16), vh, preferred_element_type=jnp.float32)
        m_scr[h] = m_new

    # ---- last KV tile: finish softmax, out-proj, add&norm, FFN, add&norm
    @pl.when(ki == nk - 1)
    def _finalize():
        # head merge folded into output projection: sublane-aligned wo row
        # slices, no attn scratch slab, no masked lane-partial stores.
        attn = jnp.zeros((tq, d_model), jnp.float32)
        for h in range(num_heads):
            inv_l = pl.reciprocal(l_scr[h], approx=False)             # exact reciprocal
            oh = (acc_scr[h] * inv_l).astype(jnp.bfloat16)            # (tq, dh)
            attn = attn + jnp.dot(oh, wo_ref[h * dh:(h + 1) * dh, :],
                                  preferred_element_type=jnp.float32)
        attn = attn + bo_ref[...]

        x = xq_ref[0]                                                 # (tq, D) f32 residual
        # TODO(synk): dropout1 / dropout2 are identity (eval mode); RNG dropout not implemented.
        h1 = _layer_norm(x + attn, g1_ref[...], be1_ref[...])         # add & norm 1
        h1b = h1.astype(jnp.bfloat16)

        # position-wise FFN, chunked over d_ff to bound the (tq, d_ff) f32 temp
        d_ff = w1_ref.shape[1]
        ff = jnp.zeros((tq, d_model), jnp.float32)
        for c0 in range(0, d_ff, ffn_chunk):
            t = jnp.dot(h1b, w1_ref[:, c0:c0 + ffn_chunk],
                        preferred_element_type=jnp.float32) + bf1_ref[:, c0:c0 + ffn_chunk]
            t = jnp.maximum(t, 0.0)                                   # ReLU
            ff = ff + jnp.dot(t.astype(jnp.bfloat16), w2_ref[c0:c0 + ffn_chunk, :],
                              preferred_element_type=jnp.float32)
        ff = ff + bf2_ref[...]

        out = _layer_norm(h1 + ff, g2_ref[...], be2_ref[...])         # add & norm 2
        out_ref[0] = out.astype(out_ref.dtype)


# --------------------------------------------------------------------------
# Wrapper
# --------------------------------------------------------------------------
def _tpu_vmem_bytes():
    try:
        return int(pltpu.get_tpu_info().vmem_capacity_bytes)
    except Exception:
        return 64 * 1024 * 1024        # conservative: assume small-VMEM part


def encoder_layer(x, mask, params, num_heads, *, tq=None, tk=None):
    """x: (B, S, D) float32, mask: (B, S) {0,1} over key positions."""
    B, S, D = x.shape
    assert D % num_heads == 0
    dh = D // num_heads

    # generation-aware tiles & scoped-VMEM budget (v7x: 64 MiB; v5e/v6e: 128 MiB)
    small_vmem = _tpu_vmem_bytes() <= 64 * 1024 * 1024
    if tq is None:
        tq = min(128 if small_vmem else 256, S)
    if tk is None:
        tk = min(256 if small_vmem else 512, S)
    assert S % tq == 0 and S % tk == 0
    nq, nkt = S // tq, S // tk
    vmem_limit = (40 if small_vmem else 80) * 1024 * 1024

    d_ff = params["w1"].shape[1]
    ffn_chunk = d_ff
    for cand in (1024, 512):
        if d_ff > cand and d_ff % cand == 0:
            ffn_chunk = cand
            break

    bf = lambda w: w.astype(jnp.bfloat16)        # matmul weights in bf16 (MXU inputs)
    x_bf = x.astype(jnp.bfloat16)                # bf16 activations into the projection
    mask_t = mask.astype(jnp.float32).reshape(B, nkt, 1, tk)
    scale = 1.0 / float(dh) ** 0.5

    qkv_w = (bf(params["wq"]), params["bq"], bf(params["wk"]), params["bk"],
             bf(params["wv"]), params["bv"])
    attn_w = (bf(params["wo"]), params["bo"],
              params["g1"], params["be1"],
              bf(params["w1"]), params["bf1"], bf(params["w2"]), params["bf2"],
              params["g2"], params["be2"])

    def run(weight_mode):
        def const_spec(p):          # constant-index 2-D param; optionally single-buffered
            if weight_mode is None:
                return pl.BlockSpec(p.shape, lambda *_: (0, 0))
            return pl.BlockSpec(p.shape, lambda *_: (0, 0), pipeline_mode=weight_mode)

        # ---------------- prologue: QKV projection, once per row -------------
        ts = tk
        ns = S // ts
        hm_shape = jax.ShapeDtypeStruct((B, num_heads, S, dh), jnp.bfloat16)
        hm_out_spec = pl.BlockSpec((1, num_heads, ts, dh), lambda b, si: (b, 0, si, 0))
        q_hm, k_hm, v_hm = pl.pallas_call(
            functools.partial(qkv_proj_kernel, num_heads=num_heads, scale=scale),
            out_shape=(hm_shape, hm_shape, hm_shape),
            grid_spec=pltpu.PrefetchScalarGridSpec(
                num_scalar_prefetch=0,
                grid=(B, ns),
                in_specs=[pl.BlockSpec((1, ts, D), lambda b, si: (b, si, 0))]
                         + [const_spec(p) for p in qkv_w],
                out_specs=(hm_out_spec, hm_out_spec, hm_out_spec),
            ),
            compiler_params=pltpu.CompilerParams(
                dimension_semantics=("parallel", "parallel"),
                vmem_limit_bytes=vmem_limit),
        )(x_bf, *qkv_w)

        # ---------------- main: flash attention + out-proj + FFN -------------
        q_spec = pl.BlockSpec((1, num_heads, tq, dh), lambda b, qi, ki: (b, 0, qi, 0))
        kv_spec = pl.BlockSpec((1, num_heads, tk, dh), lambda b, qi, ki: (b, 0, ki, 0))

        kernel = functools.partial(attn_ffn_kernel, num_heads=num_heads,
                                   ffn_chunk=ffn_chunk)
        return pl.pallas_call(
            kernel,
            out_shape=jax.ShapeDtypeStruct((B, S, D), x.dtype),
            grid_spec=pltpu.PrefetchScalarGridSpec(
                num_scalar_prefetch=0,
                grid=(B, nq, nkt),
                in_specs=[
                    pl.BlockSpec((1, tq, D), lambda b, qi, ki: (b, qi, 0)),     # residual x (f32)
                    q_spec, kv_spec, kv_spec,                                   # head-major bf16 Q/K/V
                    pl.BlockSpec((1, 1, 1, tk), lambda b, qi, ki: (b, ki, 0, 0)),  # key-mask tile
                ] + [const_spec(p) for p in attn_w],
                out_specs=pl.BlockSpec((1, tq, D), lambda b, qi, ki: (b, qi, 0)),
                scratch_shapes=[
                    pltpu.VMEM((num_heads, tq, 1), jnp.float32),    # running max
                    pltpu.VMEM((num_heads, tq, 1), jnp.float32),    # running denom
                    pltpu.VMEM((num_heads, tq, dh), jnp.float32),   # weighted-V accumulator
                ],
            ),
            compiler_params=pltpu.CompilerParams(
                dimension_semantics=("parallel", "parallel", "arbitrary"),
                vmem_limit_bytes=vmem_limit),
        )(x, q_hm, k_hm, v_hm, mask_t, *attn_w)

    try:
        return run(pl.Buffered(1))     # single-buffer the constant weight tiles
    except Exception:
        return run(None)               # fallback if single-buffering is unsupported


# --------------------------------------------------------------------------
# Pure-JAX f32 reference of the same forward pass (for validation)
# --------------------------------------------------------------------------
def _reference(x, mask, params, num_heads):
    B, S, D = x.shape
    Dh = D // num_heads
    q = x @ params["wq"] + params["bq"]
    k = x @ params["wk"] + params["bk"]
    v = x @ params["wv"] + params["bv"]

    def split(t):  # (B,S,D) -> (B,H,S,Dh)
        return t.reshape(B, S, num_heads, Dh).transpose(0, 2, 1, 3)

    qh, kh, vh = split(q), split(k), split(v)
    scores = jnp.einsum("bhqd,bhkd->bhqk", qh, kh) / jnp.sqrt(Dh).astype(jnp.float32)
    m = mask.astype(jnp.float32)[:, None, None, :]
    scores = jnp.where(m > 0.0, scores, -1e9)
    p = jax.nn.softmax(scores, axis=-1)
    o = jnp.einsum("bhqk,bhkd->bhqd", p, vh).transpose(0, 2, 1, 3).reshape(B, S, D)
    attn = o @ params["wo"] + params["bo"]

    def ln(t, g, b):
        mu = jnp.mean(t, axis=-1, keepdims=True)
        var = jnp.mean((t - mu) ** 2, axis=-1, keepdims=True)
        return (t - mu) / jnp.sqrt(var + 1e-5) * g + b

    h1 = ln(x + attn, params["g1"], params["be1"])
    ff = jnp.maximum(h1 @ params["w1"] + params["bf1"], 0.0) @ params["w2"] + params["bf2"]
    return ln(h1 + ff, params["g2"], params["be2"])


if __name__ == "__main__":
    B, S, D, H, Dff = 2, 16, 32, 4, 64
    TQ, TK = 8, 8          # 2 query tiles x 2 kv tiles per batch -> grid (2, 2, 2)

    keys = jax.random.split(jax.random.PRNGKey(0), 13)
    scale = 0.1

    params = {
        "wq": scale * jax.random.normal(keys[0], (D, D), jnp.float32),
        "bq": scale * jax.random.normal(keys[1], (1, D), jnp.float32),
        "wk": scale * jax.random.normal(keys[2], (D, D), jnp.float32),
        "bk": scale * jax.random.normal(keys[3], (1, D), jnp.float32),
        "wv": scale * jax.random.normal(keys[4], (D, D), jnp.float32),
        "bv": scale * jax.random.normal(keys[5], (1, D), jnp.float32),
        "wo": scale * jax.random.normal(keys[6], (D, D), jnp.float32),
        "bo": scale * jax.random.normal(keys[7], (1, D), jnp.float32),
        "g1": jnp.ones((1, D), jnp.float32),
        "be1": jnp.zeros((1, D), jnp.float32),
        "w1": scale * jax.random.normal(keys[8], (D, Dff), jnp.float32),
        "bf1": scale * jax.random.normal(keys[9], (1, Dff), jnp.float32),
        "w2": scale * jax.random.normal(keys[10], (Dff, D), jnp.float32),
        "bf2": scale * jax.random.normal(keys[11], (1, D), jnp.float32),
        "g2": jnp.ones((1, D), jnp.float32),
        "be2": jnp.zeros((1, D), jnp.float32),
    }

    x = jax.random.normal(keys[12], (B, S, D), jnp.float32)
    # padding mask: batch 0 fully valid, batch 1 has its last 3 key positions masked
    mask = jnp.ones((B, S), jnp.float32).at[1, -3:].set(0.0)

    out = encoder_layer(x, mask, params, num_heads=H, tq=TQ, tk=TK)
    out = jax.block_until_ready(out)

    ref = _reference(x, mask, params, num_heads=H)
    assert out.shape == (B, S, D)
    max_err = float(jnp.max(jnp.abs(out - ref)))
    # bf16 MXU operands -> looser tolerance than pure f32
    assert jnp.allclose(out, ref, rtol=5e-2, atol=5e-2), f"mismatch vs reference (max |diff|={max_err})"

    print("KERNEL_OK")
</pallas_src>

<mosaic_0001>
module attributes {stable_mosaic.version = 11 : i64} {
  func.func @qkv_proj_kernel(%arg0: i32, %arg1: i32, %arg2: memref<1x8x32xbf16, #tpu.memory_space<vmem>>, %arg3: memref<32x32xbf16, #tpu.memory_space<vmem>>, %arg4: memref<1x32xf32, #tpu.memory_space<vmem>>, %arg5: memref<32x32xbf16, #tpu.memory_space<vmem>>, %arg6: memref<1x32xf32, #tpu.memory_space<vmem>>, %arg7: memref<32x32xbf16, #tpu.memory_space<vmem>>, %arg8: memref<1x32xf32, #tpu.memory_space<vmem>>, %arg9: memref<1x4x8x8xbf16, #tpu.memory_space<vmem>>, %arg10: memref<1x4x8x8xbf16, #tpu.memory_space<vmem>>, %arg11: memref<1x4x8x8xbf16, #tpu.memory_space<vmem>>) attributes {dimension_semantics = [#tpu.dimension_semantics<parallel>, #tpu.dimension_semantics<parallel>], iteration_bounds = array<i64: 2, 2>, scalar_prefetch = 0 : i64, scratch_operands = 0 : i64, tpu.core_type = #tpu.core_type<tc>, window_params = [{transform_indices = @transform_0, window_bounds = array<i64: 1, 8, 32>}, {pipeline_mode = #tpu.pipeline_mode<synchronous>, transform_indices = @transform_1, window_bounds = array<i64: 32, 32>}, {pipeline_mode = #tpu.pipeline_mode<synchronous>, transform_indices = @transform_2, window_bounds = array<i64: 1, 32>}, {pipeline_mode = #tpu.pipeline_mode<synchronous>, transform_indices = @transform_3, window_bounds = array<i64: 32, 32>}, {pipeline_mode = #tpu.pipeline_mode<synchronous>, transform_indices = @transform_4, window_bounds = array<i64: 1, 32>}, {pipeline_mode = #tpu.pipeline_mode<synchronous>, transform_indices = @transform_5, window_bounds = array<i64: 32, 32>}, {pipeline_mode = #tpu.pipeline_mode<synchronous>, transform_indices = @transform_6, window_bounds = array<i64: 1, 32>}, {transform_indices = @transform_7, window_bounds = array<i64: 1, 4, 8, 8>}, {transform_indices = @transform_8, window_bounds = array<i64: 1, 4, 8, 8>}, {transform_indices = @transform_9, window_bounds = array<i64: 1, 4, 8, 8>}]} {
    %c0 = arith.constant 0 : index
    %c0_0 = arith.constant 0 : index
    %c0_1 = arith.constant 0 : index
    %0 = vector.load %arg2[%c0, %c0_0, %c0_1] : memref<1x8x32xbf16, #tpu.memory_space<vmem>>, vector<1x8x32xbf16>
    %1 = vector.shape_cast %0 : vector<1x8x32xbf16> to vector<8x32xbf16>
    %c0_2 = arith.constant 0 : index
    %c0_3 = arith.constant 0 : index
    %2 = vector.load %arg3[%c0_2, %c0_3] : memref<32x32xbf16, #tpu.memory_space<vmem>>, vector<32x32xbf16>
    %cst = arith.constant dense<0.000000e+00> : vector<8x32xf32>
    %3 = tpu.matmul %1, %2, %cst {dimension_numbers = #tpu.dot_dimension_numbers<[1], [0], [0], [1], [0, 0, 1, 1], [], []>} : vector<8x32xbf16>, vector<32x32xbf16>, vector<8x32xf32> -> vector<8x32xf32>
    %c0_4 = arith.constant 0 : index
    %c0_5 = arith.constant 0 : index
    %4 = vector.load %arg4[%c0_4, %c0_5] : memref<1x32xf32, #tpu.memory_space<vmem>>, vector<1x32xf32>
    %5 = vector.broadcast %4 : vector<1x32xf32> to vector<8x32xf32>
    %6 = arith.addf %3, %5 : vector<8x32xf32>
    %cst_6 = arith.constant 0.353553385 : f32
    %7 = vector.broadcast %cst_6 : f32 to vector<8x32xf32>
    %8 = arith.mulf %6, %7 : vector<8x32xf32>
    %c0_7 = arith.constant 0 : index
    %c0_8 = arith.constant 0 : index
    %9 = vector.load %arg5[%c0_7, %c0_8] : memref<32x32xbf16, #tpu.memory_space<vmem>>, vector<32x32xbf16>
    %cst_9 = arith.constant dense<0.000000e+00> : vector<8x32xf32>
    %10 = tpu.matmul %1, %9, %cst_9 {dimension_numbers = #tpu.dot_dimension_numbers<[1], [0], [0], [1], [0, 0, 1, 1], [], []>} : vector<8x32xbf16>, vector<32x32xbf16>, vector<8x32xf32> -> vector<8x32xf32>
    %c0_10 = arith.constant 0 : index
    %c0_11 = arith.constant 0 : index
    %11 = vector.load %arg6[%c0_10, %c0_11] : memref<1x32xf32, #tpu.memory_space<vmem>>, vector<1x32xf32>
    %12 = vector.broadcast %11 : vector<1x32xf32> to vector<8x32xf32>
    %13 = arith.addf %10, %12 : vector<8x32xf32>
    %c0_12 = arith.constant 0 : index
    %c0_13 = arith.constant 0 : index
    %14 = vector.load %arg7[%c0_12, %c0_13] : memref<32x32xbf16, #tpu.memory_space<vmem>>, vector<32x32xbf16>
    %cst_14 = arith.constant dense<0.000000e+00> : vector<8x32xf32>
    %15 = tpu.matmul %1, %14, %cst_14 {dimension_numbers = #tpu.dot_dimension_numbers<[1], [0], [0], [1], [0, 0, 1, 1], [], []>} : vector<8x32xbf16>, vector<32x32xbf16>, vector<8x32xf32> -> vector<8x32xf32>
    %c0_15 = arith.constant 0 : index
    %c0_16 = arith.constant 0 : index
    %16 = vector.load %arg8[%c0_15, %c0_16] : memref<1x32xf32, #tpu.memory_space<vmem>>, vector<1x32xf32>
    %17 = vector.broadcast %16 : vector<1x32xf32> to vector<8x32xf32>
    %18 = arith.addf %15, %17 : vector<8x32xf32>
    %19 = vector.extract_strided_slice %8 {offsets = [0, 0], sizes = [8, 8], strides = [1, 1]} : vector<8x32xf32> to vector<8x8xf32>
    %20 = arith.truncf %19 : vector<8x8xf32> to vector<8x8xbf16>
    %c0_17 = arith.constant 0 : index
    %c0_18 = arith.constant 0 : index
    %c0_19 = arith.constant 0 : index
    %c0_20 = arith.constant 0 : index
    %21 = vector.load %arg9[%c0_17, %c0_18, %c0_19, %c0_20] : memref<1x4x8x8xbf16, #tpu.memory_space<vmem>>, vector<1x1x8x8xbf16>
    %22 = vector.shape_cast %21 : vector<1x1x8x8xbf16> to vector<8x8xbf16>
    %23 = vector.shape_cast %20 : vector<8x8xbf16> to vector<1x1x8x8xbf16>
    tpu.vector_store %arg9[%c0_17, %c0_18, %c0_19, %c0_20], %23 {strides = array<i32>} : memref<1x4x8x8xbf16, #tpu.memory_space<vmem>>, vector<1x1x8x8xbf16>,
    %24 = vector.extract_strided_slice %13 {offsets = [0, 0], sizes = [8, 8], strides = [1, 1]} : vector<8x32xf32> to vector<8x8xf32>
    %25 = arith.truncf %24 : vector<8x8xf32> to vector<8x8xbf16>
    %c0_21 = arith.constant 0 : index
    %c0_22 = arith.constant 0 : index
    %c0_23 = arith.constant 0 : index
    %c0_24 = arith.constant 0 : index
    %26 = vector.load %arg10[%c0_21, %c0_22, %c0_23, %c0_24] : memref<1x4x8x8xbf16, #tpu.memory_space<vmem>>, vector<1x1x8x8xbf16>
    %27 = vector.shape_cast %26 : vector<1x1x8x8xbf16> to vector<8x8xbf16>
    %28 = vector.shape_cast %25 : vector<8x8xbf16> to vector<1x1x8x8xbf16>
    tpu.vector_store %arg10[%c0_21, %c0_22, %c0_23, %c0_24], %28 {strides = array<i32>} : memref<1x4x8x8xbf16, #tpu.memory_space<vmem>>, vector<1x1x8x8xbf16>,
    %29 = vector.extract_strided_slice %18 {offsets = [0, 0], sizes = [8, 8], strides = [1, 1]} : vector<8x32xf32> to vector<8x8xf32>
    %30 = arith.truncf %29 : vector<8x8xf32> to vector<8x8xbf16>
    %c0_25 = arith.constant 0 : index
    %c0_26 = arith.constant 0 : index
    %c0_27 = arith.constant 0 : index
    %c0_28 = arith.constant 0 : index
    %31 = vector.load %arg11[%c0_25, %c0_26, %c0_27, %c0_28] : memref<1x4x8x8xbf16, #tpu.memory_space<vmem>>, vector<1x1x8x8xbf16>
    %32 = vector.shape_cast %31 : vector<1x1x8x8xbf16> to vector<8x8xbf16>
    %33 = vector.shape_cast %30 : vector<8x8xbf16> to vector<1x1x8x8xbf16>
    tpu.vector_store %arg11[%c0_25, %c0_26, %c0_27, %c0_28], %33 {strides = array<i32>} : memref<1x4x8x8xbf16, #tpu.memory_space<vmem>>, vector<1x1x8x8xbf16>,
    %34 = vector.extract_strided_slice %8 {offsets = [0, 8], sizes = [8, 8], strides = [1, 1]} : vector<8x32xf32> to vector<8x8xf32>
    %35 = arith.truncf %34 : vector<8x8xf32> to vector<8x8xbf16>
    %c0_29 = arith.constant 0 : index
    %c1 = arith.constant 1 : index
    %c0_30 = arith.constant 0 : index
    %c0_31 = arith.constant 0 : index
    %36 = vector.load %arg9[%c0_29, %c1, %c0_30, %c0_31] : memref<1x4x8x8xbf16, #tpu.memory_space<vmem>>, vector<1x1x8x8xbf16>
    %37 = vector.shape_cast %36 : vector<1x1x8x8xbf16> to vector<8x8xbf16>
    %38 = vector.shape_cast %35 : vector<8x8xbf16> to vector<1x1x8x8xbf16>
    tpu.vector_store %arg9[%c0_29, %c1, %c0_30, %c0_31], %38 {strides = array<i32>} : memref<1x4x8x8xbf16, #tpu.memory_space<vmem>>, vector<1x1x8x8xbf16>,
    %39 = vector.extract_strided_slice %13 {offsets = [0, 8], sizes = [8, 8], strides = [1, 1]} : vector<8x32xf32> to vector<8x8xf32>
    %40 = arith.truncf %39 : vector<8x8xf32> to vector<8x8xbf16>
    %c0_32 = arith.constant 0 : index
    %c1_33 = arith.constant 1 : index
    %c0_34 = arith.constant 0 : index
    %c0_35 = arith.constant 0 : index
    %41 = vector.load %arg10[%c0_32, %c1_33, %c0_34, %c0_35] : memref<1x4x8x8xbf16, #tpu.memory_space<vmem>>, vector<1x1x8x8xbf16>
    %42 = vector.shape_cast %41 : vector<1x1x8x8xbf16> to vector<8x8xbf16>
    %43 = vector.shape_cast %40 : vector<8x8xbf16> to vector<1x1x8x8xbf16>
    tpu.vector_store %arg10[%c0_32, %c1_33, %c0_34, %c0_35], %43 {strides = array<i32>} : memref<1x4x8x8xbf16, #tpu.memory_space<vmem>>, vector<1x1x8x8xbf16>,
    %44 = vector.extract_strided_slice %18 {offsets = [0, 8], sizes = [8, 8], strides = [1, 1]} : vector<8x32xf32> to vector<8x8xf32>
    %45 = arith.truncf %44 : vector<8x8xf32> to vector<8x8xbf16>
    %c0_36 = arith.constant 0 : index
    %c1_37 = arith.constant 1 : index
    %c0_38 = arith.constant 0 : index
    %c0_39 = arith.constant 0 : index
    %46 = vector.load %arg11[%c0_36, %c1_37, %c0_38, %c0_39] : memref<1x4x8x8xbf16, #tpu.memory_space<vmem>>, vector<1x1x8x8xbf16>
    %47 = vector.shape_cast %46 : vector<1x1x8x8xbf16> to vector<8x8xbf16>
    %48 = vector.shape_cast %45 : vector<8x8xbf16> to vector<1x1x8x8xbf16>
    tpu.vector_store %arg11[%c0_36, %c1_37, %c0_38, %c0_39], %48 {strides = array<i32>} : memref<1x4x8x8xbf16, #tpu.memory_space<vmem>>, vector<1x1x8x8xbf16>,
    %49 = vector.extract_strided_slice %8 {offsets = [0, 16], sizes = [8, 8], strides = [1, 1]} : vector<8x32xf32> to vector<8x8xf32>
    %50 = arith.truncf %49 : vector<8x8xf32> to vector<8x8xbf16>
    %c0_40 = arith.constant 0 : index
    %c2 = arith.constant 2 : index
    %c0_41 = arith.constant 0 : index
    %c0_42 = arith.constant 0 : index
    %51 = vector.load %arg9[%c0_40, %c2, %c0_41, %c0_42] : memref<1x4x8x8xbf16, #tpu.memory_space<vmem>>, vector<1x1x8x8xbf16>
    %52 = vector.shape_cast %51 : vector<1x1x8x8xbf16> to vector<8x8xbf16>
    %53 = vector.shape_cast %50 : vector<8x8xbf16> to vector<1x1x8x8xbf16>
    tpu.vector_store %arg9[%c0_40, %c2, %c0_41, %c0_42], %53 {strides = array<i32>} : memref<1x4x8x8xbf16, #tpu.memory_space<vmem>>, vector<1x1x8x8xbf16>,
    %54 = vector.extract_strided_slice %13 {offsets = [0, 16], sizes = [8, 8], strides = [1, 1]} : vector<8x32xf32> to vector<8x8xf32>
    %55 = arith.truncf %54 : vector<8x8xf32> to vector<8x8xbf16>
    %c0_43 = arith.constant 0 : index
    %c2_44 = arith.constant 2 : index
    %c0_45 = arith.constant 0 : index
    %c0_46 = arith.constant 0 : index
    %56 = vector.load %arg10[%c0_43, %c2_44, %c0_45, %c0_46] : memref<1x4x8x8xbf16, #tpu.memory_space<vmem>>, vector<1x1x8x8xbf16>
    %57 = vector.shape_cast %56 : vector<1x1x8x8xbf16> to vector<8x8xbf16>
    %58 = vector.shape_cast %55 : vector<8x8xbf16> to vector<1x1x8x8xbf16>
    tpu.vector_store %arg10[%c0_43, %c2_44, %c0_45, %c0_46], %58 {strides = array<i32>} : memref<1x4x8x8xbf16, #tpu.memory_space<vmem>>, vector<1x1x8x8xbf16>,
    %59 = vector.extract_strided_slice %18 {offsets = [0, 16], sizes = [8, 8], strides = [1, 1]} : vector<8x32xf32> to vector<8x8xf32>
    %60 = arith.truncf %59 : vector<8x8xf32> to vector<8x8xbf16>
    %c0_47 = arith.constant 0 : index
    %c2_48 = arith.constant 2 : index
    %c0_49 = arith.constant 0 : index
    %c0_50 = arith.constant 0 : index
    %61 = vector.load %arg11[%c0_47, %c2_48, %c0_49, %c0_50] : memref<1x4x8x8xbf16, #tpu.memory_space<vmem>>, vector<1x1x8x8xbf16>
    %62 = vector.shape_cast %61 : vector<1x1x8x8xbf16> to vector<8x8xbf16>
    %63 = vector.shape_cast %60 : vector<8x8xbf16> to vector<1x1x8x8xbf16>
    tpu.vector_store %arg11[%c0_47, %c2_48, %c0_49, %c0_50], %63 {strides = array<i32>} : memref<1x4x8x8xbf16, #tpu.memory_space<vmem>>, vector<1x1x8x8xbf16>,
    %64 = vector.extract_strided_slice %8 {offsets = [0, 24], sizes = [8, 8], strides = [1, 1]} : vector<8x32xf32> to vector<8x8xf32>
    %65 = arith.truncf %64 : vector<8x8xf32> to vector<8x8xbf16>
    %c0_51 = arith.constant 0 : index
    %c3 = arith.constant 3 : index
    %c0_52 = arith.constant 0 : index
    %c0_53 = arith.constant 0 : index
    %66 = vector.load %arg9[%c0_51, %c3, %c0_52, %c0_53] : memref<1x4x8x8xbf16, #tpu.memory_space<vmem>>, vector<1x1x8x8xbf16>
    %67 = vector.shape_cast %66 : vector<1x1x8x8xbf16> to vector<8x8xbf16>
    %68 = vector.shape_cast %65 : vector<8x8xbf16> to vector<1x1x8x8xbf16>
    tpu.vector_store %arg9[%c0_51, %c3, %c0_52, %c0_53], %68 {strides = array<i32>} : memref<1x4x8x8xbf16, #tpu.memory_space<vmem>>, vector<1x1x8x8xbf16>,
    %69 = vector.extract_strided_slice %13 {offsets = [0, 24], sizes = [8, 8], strides = [1, 1]} : vector<8x32xf32> to vector<8x8xf32>
    %70 = arith.truncf %69 : vector<8x8xf32> to vector<8x8xbf16>
    %c0_54 = arith.constant 0 : index
    %c3_55 = arith.constant 3 : index
    %c0_56 = arith.constant 0 : index
    %c0_57 = arith.constant 0 : index
    %71 = vector.load %arg10[%c0_54, %c3_55, %c0_56, %c0_57] : memref<1x4x8x8xbf16, #tpu.memory_space<vmem>>, vector<1x1x8x8xbf16>
    %72 = vector.shape_cast %71 : vector<1x1x8x8xbf16> to vector<8x8xbf16>
    %73 = vector.shape_cast %70 : vector<8x8xbf16> to vector<1x1x8x8xbf16>
    tpu.vector_store %arg10[%c0_54, %c3_55, %c0_56, %c0_57], %73 {strides = array<i32>} : memref<1x4x8x8xbf16, #tpu.memory_space<vmem>>, vector<1x1x8x8xbf16>,
    %74 = vector.extract_strided_slice %18 {offsets = [0, 24], sizes = [8, 8], strides = [1, 1]} : vector<8x32xf32> to vector<8x8xf32>
    %75 = arith.truncf %74 : vector<8x8xf32> to vector<8x8xbf16>
    %c0_58 = arith.constant 0 : index
    %c3_59 = arith.constant 3 : index
    %c0_60 = arith.constant 0 : index
    %c0_61 = arith.constant 0 : index
    %76 = vector.load %arg11[%c0_58, %c3_59, %c0_60, %c0_61] : memref<1x4x8x8xbf16, #tpu.memory_space<vmem>>, vector<1x1x8x8xbf16>
    %77 = vector.shape_cast %76 : vector<1x1x8x8xbf16> to vector<8x8xbf16>
    %78 = vector.shape_cast %75 : vector<8x8xbf16> to vector<1x1x8x8xbf16>
    tpu.vector_store %arg11[%c0_58, %c3_59, %c0_60, %c0_61], %78 {strides = array<i32>} : memref<1x4x8x8xbf16, #tpu.memory_space<vmem>>, vector<1x1x8x8xbf16>,
    return
  }
  func.func @transform_0(%arg0: i32, %arg1: i32) -> (i32, i32, i32) {
    %c0_i32 = arith.constant 0 : i32
    %c0_i32_0 = arith.constant 0 : i32
    return %arg0, %arg1, %c0_i32 : i32, i32, i32
  }
  func.func @transform_1(%arg0: i32, %arg1: i32) -> (i32, i32) {
    %c0_i32 = arith.constant 0 : i32
    %c0_i32_0 = arith.constant 0 : i32
    %c0_i32_1 = arith.constant 0 : i32
    return %c0_i32, %c0_i32_0 : i32, i32
  }
  func.func @transform_2(%arg0: i32, %arg1: i32) -> (i32, i32) {
    %c0_i32 = arith.constant 0 : i32
    %c0_i32_0 = arith.constant 0 : i32
    %c0_i32_1 = arith.constant 0 : i32
    return %c0_i32, %c0_i32_0 : i32, i32
  }
  func.func @transform_3(%arg0: i32, %arg1: i32) -> (i32, i32) {
    %c0_i32 = arith.constant 0 : i32
    %c0_i32_0 = arith.constant 0 : i32
    %c0_i32_1 = arith.constant 0 : i32
    return %c0_i32, %c0_i32_0 : i32, i32
  }
  func.func @transform_4(%arg0: i32, %arg1: i32) -> (i32, i32) {
    %c0_i32 = arith.constant 0 : i32
    %c0_i32_0 = arith.constant 0 : i32
    %c0_i32_1 = arith.constant 0 : i32
    return %c0_i32, %c0_i32_0 : i32, i32
  }
  func.func @transform_5(%arg0: i32, %arg1: i32) -> (i32, i32) {
    %c0_i32 = arith.constant 0 : i32
    %c0_i32_0 = arith.constant 0 : i32
    %c0_i32_1 = arith.constant 0 : i32
    return %c0_i32, %c0_i32_0 : i32, i32
  }
  func.func @transform_6(%arg0: i32, %arg1: i32) -> (i32, i32) {
    %c0_i32 = arith.constant 0 : i32
    %c0_i32_0 = arith.constant 0 : i32
    %c0_i32_1 = arith.constant 0 : i32
    return %c0_i32, %c0_i32_0 : i32, i32
  }
  func.func @transform_7(%arg0: i32, %arg1: i32) -> (i32, i32, i32, i32) {
    %c0_i32 = arith.constant 0 : i32
    %c0_i32_0 = arith.constant 0 : i32
    %c0_i32_1 = arith.constant 0 : i32
    return %arg0, %c0_i32, %arg1, %c0_i32_0 : i32, i32, i32, i32
  }
  func.func @transform_8(%arg0: i32, %arg1: i32) -> (i32, i32, i32, i32) {
    %c0_i32 = arith.constant 0 : i32
    %c0_i32_0 = arith.constant 0 : i32
    %c0_i32_1 = arith.constant 0 : i32
    return %arg0, %c0_i32, %arg1, %c0_i32_0 : i32, i32, i32, i32
  }
  func.func @transform_9(%arg0: i32, %arg1: i32) -> (i32, i32, i32, i32) {
    %c0_i32 = arith.constant 0 : i32
    %c0_i32_0 = arith.constant 0 : i32
    %c0_i32_1 = arith.constant 0 : i32
    return %arg0, %c0_i32, %arg1, %c0_i32_0 : i32, i32, i32, i32
  }
}

module attributes {stable_mosaic.version = 11 : i64} {
  func.func @qkv_proj_kernel(%arg0: i32, %arg1: i32, %arg2: memref<1x8x32xbf16, #tpu.memory_space<vmem>>, %arg3: memref<32x32xbf16, #tpu.memory_space<vmem>>, %arg4: memref<1x32xf32, #tpu.memory_space<vmem>>, %arg5: memref<32x32xbf16, #tpu.memory_space<vmem>>, %arg6: memref<1x32xf32, #tpu.memory_space<vmem>>, %arg7: memref<32x32xbf16, #tpu.memory_space<vmem>>, %arg8: memref<1x32xf32, #tpu.memory_space<vmem>>, %arg9: memref<1x4x8x8xbf16, #tpu.memory_space<vmem>>, %arg10: memref<1x4x8x8xbf16, #tpu.memory_space<vmem>>, %arg11: memref<1x4x8x8xbf16, #tpu.memory_space<vmem>>) attributes {dimension_semantics = [#tpu.dimension_semantics<parallel>, #tpu.dimension_semantics<parallel>], iteration_bounds = array<i64: 2, 2>, scalar_prefetch = 0 : i64, scratch_operands = 0 : i64, tpu.core_type = #tpu.core_type<tc>, window_params = [{transform_indices = @transform_0, window_bounds = array<i64: 1, 8, 32>}, {pipeline_mode = #tpu.pipeline_mode<synchronous>, transform_indices = @transform_1, window_bounds = array<i64: 32, 32>}, {pipeline_mode = #tpu.pipeline_mode<synchronous>, transform_indices = @transform_2, window_bounds = array<i64: 1, 32>}, {pipeline_mode = #tpu.pipeline_mode<synchronous>, transform_indices = @transform_3, window_bounds = array<i64: 32, 32>}, {pipeline_mode = #tpu.pipeline_mode<synchronous>, transform_indices = @transform_4, window_bounds = array<i64: 1, 32>}, {pipeline_mode = #tpu.pipeline_mode<synchronous>, transform_indices = @transform_5, window_bounds = array<i64: 32, 32>}, {pipeline_mode = #tpu.pipeline_mode<synchronous>, transform_indices = @transform_6, window_bounds = array<i64: 1, 32>}, {transform_indices = @transform_7, window_bounds = array<i64: 1, 4, 8, 8>}, {transform_indices = @transform_8, window_bounds = array<i64: 1, 4, 8, 8>}, {transform_indices = @transform_9, window_bounds = array<i64: 1, 4, 8, 8>}]} {
    %c0 = arith.constant 0 : index
    %c0_0 = arith.constant 0 : index
    %c0_1 = arith.constant 0 : index
    %0 = vector.load %arg2[%c0, %c0_0, %c0_1] : memref<1x8x32xbf16, #tpu.memory_space<vmem>>, vector<1x8x32xbf16>
    %1 = vector.shape_cast %0 : vector<1x8x32xbf16> to vector<8x32xbf16>
    %c0_2 = arith.constant 0 : index
    %c0_3 = arith.constant 0 : index
    %2 = vector.load %arg3[%c0_2, %c0_3] : memref<32x32xbf16, #tpu.memory_space<vmem>>, vector<32x32xbf16>
    %cst = arith.constant dense<0.000000e+00> : vector<8x32xf32>
    %3 = tpu.matmul %1, %2, %cst {dimension_numbers = #tpu.dot_dimension_numbers<[1], [0], [0], [1], [0, 0, 1, 1], [], []>} : vector<8x32xbf16>, vector<32x32xbf16>, vector<8x32xf32> -> vector<8x32xf32>
    %c0_4 = arith.constant 0 : index
    %c0_5 = arith.constant 0 : index
    %4 = vector.load %arg4[%c0_4, %c0_5] : memref<1x32xf32, #tpu.memory_space<vmem>>, vector<1x32xf32>
    %5 = vector.broadcast %4 : vector<1x32xf32> to vector<8x32xf32>
    %6 = arith.addf %3, %5 : vector<8x32xf32>
    %cst_6 = arith.constant 0.353553385 : f32
    %7 = vector.broadcast %cst_6 : f32 to vector<8x32xf32>
    %8 = arith.mulf %6, %7 : vector<8x32xf32>
    %c0_7 = arith.constant 0 : index
    %c0_8 = arith.constant 0 : index
    %9 = vector.load %arg5[%c0_7, %c0_8] : memref<32x32xbf16, #tpu.memory_space<vmem>>, vector<32x32xbf16>
    %cst_9 = arith.constant dense<0.000000e+00> : vector<8x32xf32>
    %10 = tpu.matmul %1, %9, %cst_9 {dimension_numbers = #tpu.dot_dimension_numbers<[1], [0], [0], [1], [0, 0, 1, 1], [], []>} : vector<8x32xbf16>, vector<32x32xbf16>, vector<8x32xf32> -> vector<8x32xf32>
    %c0_10 = arith.constant 0 : index
    %c0_11 = arith.constant 0 : index
    %11 = vector.load %arg6[%c0_10, %c0_11] : memref<1x32xf32, #tpu.memory_space<vmem>>, vector<1x32xf32>
    %12 = vector.broadcast %11 : vector<1x32xf32> to vector<8x32xf32>
    %13 = arith.addf %10, %12 : vector<8x32xf32>
    %c0_12 = arith.constant 0 : index
    %c0_13 = arith.constant 0 : index
    %14 = vector.load %arg7[%c0_12, %c0_13] : memref<32x32xbf16, #tpu.memory_space<vmem>>, vector<32x32xbf16>
    %cst_14 = arith.constant dense<0.000000e+00> : vector<8x32xf32>
    %15 = tpu.matmul %1, %14, %cst_14 {dimension_numbers = #tpu.dot_dimension_numbers<[1], [0], [0], [1], [0, 0, 1, 1], [], []>} : vector<8x32xbf16>, vector<32x32xbf16>, vector<8x32xf32> -> vector<8x32xf32>
    %c0_15 = arith.constant 0 : index
    %c0_16 = arith.constant 0 : index
    %16 = vector.load %arg8[%c0_15, %c0_16] : memref<1x32xf32, #tpu.memory_space<vmem>>, vector<1x32xf32>
    %17 = vector.broadcast %16 : vector<1x32xf32> to vector<8x32xf32>
    %18 = arith.addf %15, %17 : vector<8x32xf32>
    %19 = vector.extract_strided_slice %8 {offsets = [0, 0], sizes = [8, 8], strides = [1, 1]} : vector<8x32xf32> to vector<8x8xf32>
    %20 = arith.truncf %19 : vector<8x8xf32> to vector<8x8xbf16>
    %c0_17 = arith.constant 0 : index
    %c0_18 = arith.constant 0 : index
    %c0_19 = arith.constant 0 : index
    %c0_20 = arith.constant 0 : index
    %21 = vector.load %arg9[%c0_17, %c0_18, %c0_19, %c0_20] : memref<1x4x8x8xbf16, #tpu.memory_space<vmem>>, vector<1x1x8x8xbf16>
    %22 = vector.shape_cast %21 : vector<1x1x8x8xbf16> to vector<8x8xbf16>
    %23 = vector.shape_cast %20 : vector<8x8xbf16> to vector<1x1x8x8xbf16>
    tpu.vector_store %arg9[%c0_17, %c0_18, %c0_19, %c0_20], %23 {strides = array<i32>} : memref<1x4x8x8xbf16, #tpu.memory_space<vmem>>, vector<1x1x8x8xbf16>,
    %24 = vector.extract_strided_slice %13 {offsets = [0, 0], sizes = [8, 8], strides = [1, 1]} : vector<8x32xf32> to vector<8x8xf32>
    %25 = arith.truncf %24 : vector<8x8xf32> to vector<8x8xbf16>
    %c0_21 = arith.constant 0 : index
    %c0_22 = arith.constant 0 : index
    %c0_23 = arith.constant 0 : index
    %c0_24 = arith.constant 0 : index
    %26 = vector.load %arg10[%c0_21, %c0_22, %c0_23, %c0_24] : memref<1x4x8x8xbf16, #tpu.memory_space<vmem>>, vector<1x1x8x8xbf16>
    %27 = vector.shape_cast %26 : vector<1x1x8x8xbf16> to vector<8x8xbf16>
    %28 = vector.shape_cast %25 : vector<8x8xbf16> to vector<1x1x8x8xbf16>
    tpu.vector_store %arg10[%c0_21, %c0_22, %c0_23, %c0_24], %28 {strides = array<i32>} : memref<1x4x8x8xbf16, #tpu.memory_space<vmem>>, vector<1x1x8x8xbf16>,
    %29 = vector.extract_strided_slice %18 {offsets = [0, 0], sizes = [8, 8], strides = [1, 1]} : vector<8x32xf32> to vector<8x8xf32>
    %30 = arith.truncf %29 : vector<8x8xf32> to vector<8x8xbf16>
    %c0_25 = arith.constant 0 : index
    %c0_26 = arith.constant 0 : index
    %c0_27 = arith.constant 0 : index
    %c0_28 = arith.constant 0 : index
    %31 = vector.load %arg11[%c0_25, %c0_26, %c0_27, %c0_28] : memref<1x4x8x8xbf16, #tpu.memory_space<vmem>>, vector<1x1x8x8xbf16>
    %32 = vector.shape_cast %31 : vector<1x1x8x8xbf16> to vector<8x8xbf16>
    %33 = vector.shape_cast %30 : vector<8x8xbf16> to vector<1x1x8x8xbf16>
    tpu.vector_store %arg11[%c0_25, %c0_26, %c0_27, %c0_28], %33 {strides = array<i32>} : memref<1x4x8x8xbf16, #tpu.memory_space<vmem>>, vector<1x1x8x8xbf16>,
    %34 = vector.extract_strided_slice %8 {offsets = [0, 8], sizes = [8, 8], strides = [1, 1]} : vector<8x32xf32> to vector<8x8xf32>
    %35 = arith.truncf %34 : vector<8x8xf32> to vector<8x8xbf16>
    %c0_29 = arith.constant 0 : index
    %c1 = arith.constant 1 : index
    %c0_30 = arith.constant 0 : index
    %c0_31 = arith.constant 0 : index
    %36 = vector.load %arg9[%c0_29, %c1, %c0_30, %c0_31] : memref<1x4x8x8xbf16, #tpu.memory_space<vmem>>, vector<1x1x8x8xbf16>
    %37 = vector.shape_cast %36 : vector<1x1x8x8xbf16> to vector<8x8xbf16>
    %38 = vector.shape_cast %35 : vector<8x8xbf16> to vector<1x1x8x8xbf16>
    tpu.vector_store %arg9[%c0_29, %c1, %c0_30, %c0_31], %38 {strides = array<i32>} : memref<1x4x8x8xbf16, #tpu.memory_space<vmem>>, vector<1x1x8x8xbf16>,
    %39 = vector.extract_strided_slice %13 {offsets = [0, 8], sizes = [8, 8], strides = [1, 1]} : vector<8x32xf32> to vector<8x8xf32>
    %40 = arith.truncf %39 : vector<8x8xf32> to vector<8x8xbf16>
    %c0_32 = arith.constant 0 : index
    %c1_33 = arith.constant 1 : index
    %c0_34 = arith.constant 0 : index
    %c0_35 = arith.constant 0 : index
    %41 = vector.load %arg10[%c0_32, %c1_33, %c0_34, %c0_35] : memref<1x4x8x8xbf16, #tpu.memory_space<vmem>>, vector<1x1x8x8xbf16>
    %42 = vector.shape_cast %41 : vector<1x1x8x8xbf16> to vector<8x8xbf16>
    %43 = vector.shape_cast %40 : vector<8x8xbf16> to vector<1x1x8x8xbf16>
    tpu.vector_store %arg10[%c0_32, %c1_33, %c0_34, %c0_35], %43 {strides = array<i32>} : memref<1x4x8x8xbf16, #tpu.memory_space<vmem>>, vector<1x1x8x8xbf16>,
    %44 = vector.extract_strided_slice %18 {offsets = [0, 8], sizes = [8, 8], strides = [1, 1]} : vector<8x32xf32> to vector<8x8xf32>
    %45 = arith.truncf %44 : vector<8x8xf32> to vector<8x8xbf16>
    %c0_36 = arith.constant 0 : index
    %c1_37 = arith.constant 1 : index
    %c0_38 = arith.constant 0 : index
    %c0_39 = arith.constant 0 : index
    %46 = vector.load %arg11[%c0_36, %c1_37, %c0_38, %c0_39] : memref<1x4x8x8xbf16, #tpu.memory_space<vmem>>, vector<1x1x8x8xbf16>
    %47 = vector.shape_cast %46 : vector<1x1x8x8xbf16> to vector<8x8xbf16>
    %48 = vector.shape_cast %45 : vector<8x8xbf16> to vector<1x1x8x8xbf16>
    tpu.vector_store %arg11[%c0_36, %c1_37, %c0_38, %c0_39], %48 {strides = array<i32>} : memref<1x4x8x8xbf16, #tpu.memory_space<vmem>>, vector<1x1x8x8xbf16>,
    %49 = vector.extract_strided_slice %8 {offsets = [0, 16], sizes = [8, 8], strides = [1, 1]} : vector<8x32xf32> to vector<8x8xf32>
    %50 = arith.truncf %49 : vector<8x8xf32> to vector<8x8xbf16>
    %c0_40 = arith.constant 0 : index
    %c2 = arith.constant 2 : index
    %c0_41 = arith.constant 0 : index
    %c0_42 = arith.constant 0 : index
    %51 = vector.load %arg9[%c0_40, %c2, %c0_41, %c0_42] : memref<1x4x8x8xbf16, #tpu.memory_space<vmem>>, vector<1x1x8x8xbf16>
    %52 = vector.shape_cast %51 : vector<1x1x8x8xbf16> to vector<8x8xbf16>
    %53 = vector.shape_cast %50 : vector<8x8xbf16> to vector<1x1x8x8xbf16>
    tpu.vector_store %arg9[%c0_40, %c2, %c0_41, %c0_42], %53 {strides = array<i32>} : memref<1x4x8x8xbf16, #tpu.memory_space<vmem>>, vector<1x1x8x8xbf16>,
    %54 = vector.extract_strided_slice %13 {offsets = [0, 16], sizes = [8, 8], strides = [1, 1]} : vector<8x32xf32> to vector<8x8xf32>
    %55 = arith.truncf %54 : vector<8x8xf32> to vector<8x8xbf16>
    %c0_43 = arith.constant 0 : index
    %c2_44 = arith.constant 2 : index
    %c0_45 = arith.constant 0 : index
    %c0_46 = arith.constant 0 : index
    %56 = vector.load %arg10[%c0_43, %c2_44, %c0_45, %c0_46] : memref<1x4x8x8xbf16, #tpu.memory_space<vmem>>, vector<1x1x8x8xbf16>
    %57 = vector.shape_cast %56 : vector<1x1x8x8xbf16> to vector<8x8xbf16>
    %58 = vector.shape_cast %55 : vector<8x8xbf16> to vector<1x1x8x8xbf16>
    tpu.vector_store %arg10[%c0_43, %c2_44, %c0_45, %c0_46], %58 {strides = array<i32>} : memref<1x4x8x8xbf16, #tpu.memory_space<vmem>>, vector<1x1x8x8xbf16>,
    %59 = vector.extract_strided_slice %18 {offsets = [0, 16], sizes = [8, 8], strides = [1, 1]} : vector<8x32xf32> to vector<8x8xf32>
    %60 = arith.truncf %59 : vector<8x8xf32> to vector<8x8xbf16>
    %c0_47 = arith.constant 0 : index
    %c2_48 = arith.constant 2 : index
    %c0_49 = arith.constant 0 : index
    %c0_50 = arith.constant 0 : index
    %61 = vector.load %arg11[%c0_47, %c2_48, %c0_49, %c0_50] : memref<1x4x8x8xbf16, #tpu.memory_space<vmem>>, vector<1x1x8x8xbf16>
    %62 = vector.shape_cast %61 : vector<1x1x8x8xbf16> to vector<8x8xbf16>
    %63 = vector.shape_cast %60 : vector<8x8xbf16> to vector<1x1x8x8xbf16>
    tpu.vector_store %arg11[%c0_47, %c2_48, %c0_49, %c0_50], %63 {strides = array<i32>} : memref<1x4x8x8xbf16, #tpu.memory_space<vmem>>, vector<1x1x8x8xbf16>,
    %64 = vector.extract_strided_slice %8 {offsets = [0, 24], sizes = [8, 8], strides = [1, 1]} : vector<8x32xf32> to vector<8x8xf32>
    %65 = arith.truncf %64 : vector<8x8xf32> to vector<8x8xbf16>
    %c0_51 = arith.constant 0 : index
    %c3 = arith.constant 3 : index
    %c0_52 = arith.constant 0 : index
    %c0_53 = arith.constant 0 : index
    %66 = vector.load %arg9[%c0_51, %c3, %c0_52, %c0_53] : memref<1x4x8x8xbf16, #tpu.memory_space<vmem>>, vector<1x1x8x8xbf16>
    %67 = vector.shape_cast %66 : vector<1x1x8x8xbf16> to vector<8x8xbf16>
    %68 = vector.shape_cast %65 : vector<8x8xbf16> to vector<1x1x8x8xbf16>
    tpu.vector_store %arg9[%c0_51, %c3, %c0_52, %c0_53], %68 {strides = array<i32>} : memref<1x4x8x8xbf16, #tpu.memory_space<vmem>>, vector<1x1x8x8xbf16>,
    %69 = vector.extract_strided_slice %13 {offsets = [0, 24], sizes = [8, 8], strides = [1, 1]} : vector<8x32xf32> to vector<8x8xf32>
    %70 = arith.truncf %69 : vector<8x8xf32> to vector<8x8xbf16>
    %c0_54 = arith.constant 0 : index
    %c3_55 = arith.constant 3 : index
    %c0_56 = arith.constant 0 : index
    %c0_57 = arith.constant 0 : index
    %71 = vector.load %arg10[%c0_54, %c3_55, %c0_56, %c0_57] : memref<1x4x8x8xbf16, #tpu.memory_space<vmem>>, vector<1x1x8x8xbf16>
    %72 = vector.shape_cast %71 : vector<1x1x8x8xbf16> to vector<8x8xbf16>
    %73 = vector.shape_cast %70 : vector<8x8xbf16> to vector<1x1x8x8xbf16>
    tpu.vector_store %arg10[%c0_54, %c3_55, %c0_56, %c0_57], %73 {strides = array<i32>} : memref<1x4x8x8xbf16, #tpu.memory_space<vmem>>, vector<1x1x8x8xbf16>,
    %74 = vector.extract_strided_slice %18 {offsets = [0, 24], sizes = [8, 8], strides = [1, 1]} : vector<8x32xf32> to vector<8x8xf32>
    %75 = arith.truncf %74 : vector<8x8xf32> to vector<8x8xbf16>
    %c0_58 = arith.constant 0 : index
    %c3_59 = arith.constant 3 : index
    %c0_60 = arith.constant 0 : index
    %c0_61 = arith.constant 0 : index
    %76 = vector.load %arg11[%c0_58, %c3_59, %c0_60, %c0_61] : memref<1x4x8x8xbf16, #tpu.memory_space<vmem>>, vector<1x1x8x8xbf16>
    %77 = vector.shape_cast %76 : vector<1x1x8x8xbf16> to vector<8x8xbf16>
    %78 = vector.shape_cast %75 : vector<8x8xbf16> to vector<1x1x8x8xbf16>
    tpu.vector_store %arg11[%c0_58, %c3_59, %c0_60, %c0_61], %78 {strides = array<i32>} : memref<1x4x8x8xbf16, #tpu.memory_space<vmem>>, vector<1x1x8x8xbf16>,
    return
  }
  func.func @transform_0(%arg0: i32, %arg1: i32) -> (i32, i32, i32) {
    %c0_i32 = arith.constant 0 : i32
    %c0_i32_0 = arith.constant 0 : i32
    return %arg0, %arg1, %c0_i32 : i32, i32, i32
  }
  func.func @transform_1(%arg0: i32, %arg1: i32) -> (i32, i32) {
    %c0_i32 = arith.constant 0 : i32
    %c0_i32_0 = arith.constant 0 : i32
    %c0_i32_1 = arith.constant 0 : i32
    return %c0_i32, %c0_i32_0 : i32, i32
  }
  func.func @transform_2(%arg0: i32, %arg1: i32) -> (i32, i32) {
    %c0_i32 = arith.constant 0 : i32
    %c0_i32_0 = arith.constant 0 : i32
    %c0_i32_1 = arith.constant 0 : i32
    return %c0_i32, %c0_i32_0 : i32, i32
  }
  func.func @transform_3(%arg0: i32, %arg1: i32) -> (i32, i32) {
    %c0_i32 = arith.constant 0 : i32
    %c0_i32_0 = arith.constant 0 : i32
    %c0_i32_1 = arith.constant 0 : i32
    return %c0_i32, %c0_i32_0 : i32, i32
  }
  func.func @transform_4(%arg0: i32, %arg1: i32) -> (i32, i32) {
    %c0_i32 = arith.constant 0 : i32
    %c0_i32_0 = arith.constant 0 : i32
    %c0_i32_1 = arith.constant 0 : i32
    return %c0_i32, %c0_i32_0 : i32, i32
  }
  func.func @transform_5(%arg0: i32, %arg1: i32) -> (i32, i32) {
    %c0_i32 = arith.constant 0 : i32
    %c0_i32_0 = arith.constant 0 : i32
    %c0_i32_1 = arith.constant 0 : i32
    return %c0_i32, %c0_i32_0 : i32, i32
  }
  func.func @transform_6(%arg0: i32, %arg1: i32) -> (i32, i32) {
    %c0_i32 = arith.constant 0 : i32
    %c0_i32_0 = arith.constant 0 : i32
    %c0_i32_1 = arith.constant 0 : i32
    return %c0_i32, %c0_i32_0 : i32, i32
  }
  func.func @transform_7(%arg0: i32, %arg1: i32) -> (i32, i32, i32, i32) {
    %c0_i32 = arith.constant 0 : i32
    %c0_i32_0 = arith.constant 0 : i32
    %c0_i32_1 = arith.constant 0 : i32
    return %arg0, %c0_i32, %arg1, %c0_i32_0 : i32, i32, i32, i32
  }
  func.func @transform_8(%arg0: i32, %arg1: i32) -> (i32, i32, i32, i32) {
    %c0_i32 = arith.constant 0 : i32
    %c0_i32_0 = arith.constant 0 : i32
    %c0_i32_1 = arith.constant 0 : i32
    return %arg0, %c0_i32, %arg1, %c0_i32_0 : i32, i32, i32, i32
  }
  func.func @transform_9(%arg0: i32, %arg1: i32) -> (i32, i32, i32, i32) {
    %c0_i32 = arith.constant 0 : i32
    %c0_i32_0 = arith.constant 0 : i32
    %c0_i32_1 = arith.constant 0 : i32
    return %arg0, %c0_i32, %arg1, %c0_i32_0 : i32, i32, i32, i32
  }
}

</mosaic_0001>

<llo_original>
// kernel: tpu_custom_call.1
$region0: #{tpu_custom_call.1}
  #allocation0 [shape = 'u32[]', space=smem, size = 0x4, offset = 0x4, fixed_abs, tag = 'smem constant byte address 0x4 - core index']
  #allocation1 [shape = 'u32[144,128]{1,0:T(1,128)}', space=vmem, size = 0x12000, scoped, tag = 'internal scratch']
  %s0 = inlined_call_operand.hbm [shape: bf16[2,16,32], index: 0, kind: input, shape index: {}]
  %s1 = inlined_call_operand.hbm [shape: bf16[32,32], index: 1, kind: input, shape index: {}]
  %s2 = inlined_call_operand.vmem [shape: f32[1,32], index: 2, kind: input, shape index: {}]
  %s3 = inlined_call_operand.hbm [shape: bf16[32,32], index: 3, kind: input, shape index: {}]
  %s4 = inlined_call_operand.vmem [shape: f32[1,32], index: 4, kind: input, shape index: {}]
  %s5 = inlined_call_operand.vmem [shape: bf16[32,32], index: 5, kind: input, shape index: {}]
  %s6 = inlined_call_operand.vmem [shape: f32[1,32], index: 6, kind: input, shape index: {}]
  %s7 = inlined_call_operand.vmem [shape: bf16[2,4,16,8], index: 7, kind: output, shape index: {0}]
  %s8 = inlined_call_operand.vmem [shape: bf16[2,4,16,8], index: 8, kind: output, shape index: {1}]
  %s9 = inlined_call_operand.vmem [shape: bf16[2,4,16,8], index: 9, kind: output, shape index: {2}]
  %10 = xla_tuple %s7, %s8, %s9
  %s11 = sld [smem:[#allocation0]]
  $region200: #{tpu_custom_call.1} parent=0
    _
  %s13 = ssub.s32 1, %s11
  %s14 = scalar_select 0, %s13, %s11
  $region1: #{tpu_custom_call.1} parent=0
    #allocation2 [shape = 'u8[4096]{0}', space=vmem, size = 0x1000, scoped, tag = 'input window, operand 0']
    #allocation3 [shape = 's32[2]{0}', space=sflag, size = 0x8, scoped, tag = 'scoped memory for tpu_custom_call.1']
    #allocation4 [shape = 'u8[8192]{0}', space=vmem, size = 0x2000, scoped, tag = 'input window, operand 1, single buffered']
    #allocation5 [shape = 's32[1]{0}', space=sflag, size = 0x4, scoped, tag = 'scoped memory for tpu_custom_call.1']
    #allocation6 [shape = 'u8[8192]{0}', space=vmem, size = 0x2000, scoped, tag = 'input window, operand 3, single buffered']
    #allocation7 [shape = 'u8[16384]{0}', space=vmem, size = 0x4000, scoped, tag = 'output window, operand 0']
    #allocation8 [shape = 'u8[16384]{0}', space=vmem, size = 0x4000, scoped, tag = 'output window, operand 1']
    #allocation9 [shape = 'u8[16384]{0}', space=vmem, size = 0x4000, scoped, tag = 'output window, operand 2']
    %15 = vsyncpa [#allocation3], 0
    %s16 = scalar_lea.sflag [#allocation3], 1
    %17 = vsyncpa %s16, 0
    %18 = vsyncpa [#allocation5], 0
    loop: start=0, step=1, limit=6
    $region2: #{tpu_custom_call.1} parent=1 // loop_pre_header
      _
    $region3: #{tpu_custom_call.1} parent=1 // loop_header
      %s20 = sphi 0, %s24
      %p21 = scmp.ge.s32.totalorder %s20, 6
      %s27 = sphi 0, %s39
      %s28 = sphi 0, %s35
      %s29 = sphi 0, %s27
      %s30 = sphi 0, %s28
      %s31 = sphi 0, %s29
      %s32 = sphi 0, %s30
      %s44 = sphi 0, %s46
      %s47 = sphi 0, %s44
      %s48 = sphi 0, %s47
      %s64 = sphi 0, %s48
      %s68 = sphi 0, %s68
      %s70 = sphi 0, %s68
      %s71 = sphi 0, %s70
      %s85 = sphi 0, %s71
      %s89 = sphi 0, %s89
      %s91 = sphi 0, %s89
      %s92 = sphi 0, %s91
      %s106 = sphi 0, %s92
      %s110 = sphi 0, %s110
      %s112 = sphi 0, %s110
      %s113 = sphi 0, %s112
      %s127 = sphi 0, %s113
      %s131 = sphi 0, %s131
      %s133 = sphi 0, %s131
      %s134 = sphi 0, %s133
      %s148 = sphi 0, %s134
      %s152 = sphi 0, %s152
      %s154 = sphi 0, %s152
      %s155 = sphi 0, %s154
      %s169 = sphi 0, %s155
      %s173 = sphi 0, %s173
      %s175 = sphi 0, %s173
      %s176 = sphi 0, %s175
      %s190 = sphi 0, %s176
      %s198 = sphi 0, %s200
      %s201 = sphi 0, %s198
      %s202 = sphi 0, %s201
      %s218 = sphi 0, %s202
      %s226 = sphi 0, %s228
      %s229 = sphi 0, %s226
      %s230 = sphi 0, %s229
      %s246 = sphi 0, %s230
      %s254 = sphi 0, %s256
      %s257 = sphi 0, %s254
      %s258 = sphi 0, %s257
      %s274 = sphi 0, %s258
    $region4: #{tpu_custom_call.1} parent=1 // loop_header_branch
      %23 = sbr.rel (%p21) target = $region8
    $region5: #{tpu_custom_call.1} parent=1 // loop_body
      %s25 = ssub.s32 %s20, 1
      %s26 = ssub.s32 %s20, 2
      %s33 = sadd.s32 1, %s28
      %p34 = scmp.ge.s32.totalorder %s33, 2
      %s35 = scalar_select %p34, 0, %s33
      %s36 = sadd.s32 1, %s27
      %s37 = scalar_select %p34, %s36, %s27
      %p38 = scmp.ge.s32.totalorder %s37, 2
      %s39 = scalar_select %p38, 0, %s37
      %s40 = ssub.s32 %s27, %s39
      %s41 = ssub.s32 %s28, %s35
      %s42 = sor.u32 %s40, %s41
      %p43 = scmp.eq.s32.totalorder %s42, 0
      %s45 = sadd.s32 %s44, 1
      %s46 = scalar_select %p43, %s44, %s45
      %p49 = pneg %p43
      %p50 = scmp.eq.s32.totalorder %s20, 3
      %p51 = por %p49, %p50
      %p52 = scmp.ne.s32.totalorder %s44, %s47
      %p53 = scmp.eq.s32.totalorder %s20, 0
      %p54 = por %p52, %p53
      %p55 = scmp.ne.s32.totalorder %s44, %s47
      %p56 = scmp.eq.s32.totalorder %s25, 3
      %p57 = por %p55, %p56
      %p58 = scmp.ne.s32.totalorder %s47, %s48
      %p59 = scmp.eq.s32.totalorder %s25, 0
      %p60 = por %p58, %p59
      %p61 = scmp.ne.s32.totalorder %s47, %s48
      %p62 = scmp.eq.s32.totalorder %s26, 3
      %p63 = por %p61, %p62
      %p65 = scmp.ne.s32.totalorder %s48, %s64
      %p66 = scmp.eq.s32.totalorder %s26, 0
      %p67 = por %p65, %p66
      %s69 = sadd.s32 %s68, 1
      %p72 = scmp.eq.s32.totalorder %s20, 3
      %p73 = scmp.ne.s32.totalorder %s68, %s70
      %p74 = scmp.eq.s32.totalorder %s20, 0
      %p75 = por %p73, %p74
      %p76 = scmp.ne.s32.totalorder %s68, %s70
      %p77 = scmp.eq.s32.totalorder %s25, 3
      %p78 = por %p76, %p77
      %p79 = scmp.ne.s32.totalorder %s70, %s71
      %p80 = scmp.eq.s32.totalorder %s25, 0
      %p81 = por %p79, %p80
      %p82 = scmp.ne.s32.totalorder %s70, %s71
      %p83 = scmp.eq.s32.totalorder %s26, 3
      %p84 = por %p82, %p83
      %p86 = scmp.ne.s32.totalorder %s71, %s85
      %p87 = scmp.eq.s32.totalorder %s26, 0
      %p88 = por %p86, %p87
      %s90 = sadd.s32 %s89, 1
      %p93 = scmp.eq.s32.totalorder %s20, 3
      %p94 = scmp.ne.s32.totalorder %s89, %s91
      %p95 = scmp.eq.s32.totalorder %s20, 0
      %p96 = por %p94, %p95
      %p97 = scmp.ne.s32.totalorder %s89, %s91
      %p98 = scmp.eq.s32.totalorder %s25, 3
      %p99 = por %p97, %p98
      %p100 = scmp.ne.s32.totalorder %s91, %s92
      %p101 = scmp.eq.s32.totalorder %s25, 0
      %p102 = por %p100, %p101
      %p103 = scmp.ne.s32.totalorder %s91, %s92
      %p104 = scmp.eq.s32.totalorder %s26, 3
      %p105 = por %p103, %p104
      %p107 = scmp.ne.s32.totalorder %s92, %s106
      %p108 = scmp.eq.s32.totalorder %s26, 0
      %p109 = por %p107, %p108
      %s111 = sadd.s32 %s110, 1
      %p114 = scmp.eq.s32.totalorder %s20, 3
      %p115 = scmp.ne.s32.totalorder %s110, %s112
      %p116 = scmp.eq.s32.totalorder %s20, 0
      %p117 = por %p115, %p116
      %p118 = scmp.ne.s32.totalorder %s110, %s112
      %p119 = scmp.eq.s32.totalorder %s25, 3
      %p120 = por %p118, %p119
      %p121 = scmp.ne.s32.totalorder %s112, %s113
      %p122 = scmp.eq.s32.totalorder %s25, 0
      %p123 = por %p121, %p122
      %p124 = scmp.ne.s32.totalorder %s112, %s113
      %p125 = scmp.eq.s32.totalorder %s26, 3
      %p126 = por %p124, %p125
      %p128 = scmp.ne.s32.totalorder %s113, %s127
      %p129 = scmp.eq.s32.totalorder %s26, 0
      %p130 = por %p128, %p129
      %s132 = sadd.s32 %s131, 1
      %p135 = scmp.eq.s32.totalorder %s20, 3
      %p136 = scmp.ne.s32.totalorder %s131, %s133
      %p137 = scmp.eq.s32.totalorder %s20, 0
      %p138 = por %p136, %p137
      %p139 = scmp.ne.s32.totalorder %s131, %s133
      %p140 = scmp.eq.s32.totalorder %s25, 3
      %p141 = por %p139, %p140
      %p142 = scmp.ne.s32.totalorder %s133, %s134
      %p143 = scmp.eq.s32.totalorder %s25, 0
      %p144 = por %p142, %p143
      %p145 = scmp.ne.s32.totalorder %s133, %s134
      %p146 = scmp.eq.s32.totalorder %s26, 3
      %p147 = por %p145, %p146
      %p149 = scmp.ne.s32.totalorder %s134, %s148
      %p150 = scmp.eq.s32.totalorder %s26, 0
      %p151 = por %p149, %p150
      %s153 = sadd.s32 %s152, 1
      %p156 = scmp.eq.s32.totalorder %s20, 3
      %p157 = scmp.ne.s32.totalorder %s152, %s154
      %p158 = scmp.eq.s32.totalorder %s20, 0
      %p159 = por %p157, %p158
      %p160 = scmp.ne.s32.totalorder %s152, %s154
      %p161 = scmp.eq.s32.totalorder %s25, 3
      %p162 = por %p160, %p161
      %p163 = scmp.ne.s32.totalorder %s154, %s155
      %p164 = scmp.eq.s32.totalorder %s25, 0
      %p165 = por %p163, %p164
      %p166 = scmp.ne.s32.totalorder %s154, %s155
      %p167 = scmp.eq.s32.totalorder %s26, 3
      %p168 = por %p166, %p167
      %p170 = scmp.ne.s32.totalorder %s155, %s169
      %p171 = scmp.eq.s32.totalorder %s26, 0
      %p172 = por %p170, %p171
      %s174 = sadd.s32 %s173, 1
      %p177 = scmp.eq.s32.totalorder %s20, 3
      %p178 = scmp.ne.s32.totalorder %s173, %s175
      %p179 = scmp.eq.s32.totalorder %s20, 0
      %p180 = por %p178, %p179
      %p181 = scmp.ne.s32.totalorder %s173, %s175
      %p182 = scmp.eq.s32.totalorder %s25, 3
      %p183 = por %p181, %p182
      %p184 = scmp.ne.s32.totalorder %s175, %s176
      %p185 = scmp.eq.s32.totalorder %s25, 0
      %p186 = por %p184, %p185
      %p187 = scmp.ne.s32.totalorder %s175, %s176
      %p188 = scmp.eq.s32.totalorder %s26, 3
      %p189 = por %p187, %p188
      %p191 = scmp.ne.s32.totalorder %s176, %s190
      %p192 = scmp.eq.s32.totalorder %s26, 0
      %p193 = por %p191, %p192
      %s194 = ssub.s32 %s27, %s39
      %s195 = ssub.s32 %s28, %s35
      %s196 = sor.u32 %s194, %s195
      %p197 = scmp.eq.s32.totalorder %s196, 0
      %s199 = sadd.s32 %s198, 1
      %s200 = scalar_select %p197, %s198, %s199
      %p203 = pneg %p197
      %p204 = scmp.eq.s32.totalorder %s20, 3
      %p205 = por %p203, %p204
      %p206 = scmp.ne.s32.totalorder %s198, %s201
      %p207 = scmp.eq.s32.totalorder %s20, 0
      %p208 = por %p206, %p207
      %p209 = scmp.ne.s32.totalorder %s198, %s201
      %p210 = scmp.eq.s32.totalorder %s25, 3
      %p211 = por %p209, %p210
      %p212 = scmp.ne.s32.totalorder %s201, %s202
      %p213 = scmp.eq.s32.totalorder %s25, 0
      %p214 = por %p212, %p213
      %p215 = scmp.ne.s32.totalorder %s201, %s202
      %p216 = scmp.eq.s32.totalorder %s26, 3
      %p217 = por %p215, %p216
      %p219 = scmp.ne.s32.totalorder %s202, %s218
      %p220 = scmp.eq.s32.totalorder %s26, 0
      %p221 = por %p219, %p220
      %s222 = ssub.s32 %s27, %s39
      %s223 = ssub.s32 %s28, %s35
      %s224 = sor.u32 %s222, %s223
      %p225 = scmp.eq.s32.totalorder %s224, 0
      %s227 = sadd.s32 %s226, 1
      %s228 = scalar_select %p225, %s226, %s227
      %p231 = pneg %p225
      %p232 = scmp.eq.s32.totalorder %s20, 3
      %p233 = por %p231, %p232
      %p234 = scmp.ne.s32.totalorder %s226, %s229
      %p235 = scmp.eq.s32.totalorder %s20, 0
      %p236 = por %p234, %p235
      %p237 = scmp.ne.s32.totalorder %s226, %s229
      %p238 = scmp.eq.s32.totalorder %s25, 3
      %p239 = por %p237, %p238
      %p240 = scmp.ne.s32.totalorder %s229, %s230
      %p241 = scmp.eq.s32.totalorder %s25, 0
      %p242 = por %p240, %p241
      %p243 = scmp.ne.s32.totalorder %s229, %s230
      %p244 = scmp.eq.s32.totalorder %s26, 3
      %p245 = por %p243, %p244
      %p247 = scmp.ne.s32.totalorder %s230, %s246
      %p248 = scmp.eq.s32.totalorder %s26, 0
      %p249 = por %p247, %p248
      %s250 = ssub.s32 %s27, %s39
      %s251 = ssub.s32 %s28, %s35
      %s252 = sor.u32 %s250, %s251
      %p253 = scmp.eq.s32.totalorder %s252, 0
      %s255 = sadd.s32 %s254, 1
      %s256 = scalar_select %p253, %s254, %s255
      %p259 = pneg %p253
      %p260 = scmp.eq.s32.totalorder %s20, 3
      %p261 = por %p259, %p260
      %p262 = scmp.ne.s32.totalorder %s254, %s257
      %p263 = scmp.eq.s32.totalorder %s20, 0
      %p264 = por %p262, %p263
      %p265 = scmp.ne.s32.totalorder %s254, %s257
      %p266 = scmp.eq.s32.totalorder %s25, 3
      %p267 = por %p265, %p266
      %p268 = scmp.ne.s32.totalorder %s257, %s258
      %p269 = scmp.eq.s32.totalorder %s25, 0
      %p270 = por %p268, %p269
      %p271 = scmp.ne.s32.totalorder %s257, %s258
      %p272 = scmp.eq.s32.totalorder %s26, 3
      %p273 = por %p271, %p272
      %p275 = scmp.ne.s32.totalorder %s258, %s274
      %p276 = scmp.eq.s32.totalorder %s26, 0
      %p277 = por %p275, %p276
      %p278 = scmp.le.s32.totalorder 1, %s20
      %p279 = scmp.lt.s32.totalorder %s20, 5
      %p280 = pnand %p278, %p279
      %p281 = pneg %p280
      // Predicated region
      $region9: #{tpu_custom_call.1} parent=5 // pred_check
        _
      $region10: #{tpu_custom_call.1} parent=5 // pred_check_branch
        %283 = sbr.rel (%p280) target = $region12
      $region11: #{tpu_custom_call.1} parent=5 // pred_region
        %s284 = ssub.s32 %s20, 1
        // Predicated region
        $region13: #{tpu_custom_call.1} parent=11 // pred_check
          %p285 = pneg %p81
        $region14: #{tpu_custom_call.1} parent=11 // pred_check_branch
          %287 = sbr.rel (%p285) target = $region16
        $region15: #{tpu_custom_call.1} parent=11 // pred_region
          %s289 = ssub.s32 256, 256
          %290 = vsyncadd [#allocation5], %s289
          %s291 = sshll.u32 [#allocation4], 4
          %s292 = int_to_ptr.vmem [resolvable:$true] %s291
          %297 = dma.hbm_to_vmem [thread:$0]  %s1, 256, %s292, [#allocation5], 64, 64, 4
        $region16: #{tpu_custom_call.1} parent=11 // pred_fallthru
          _
        // Predicated region
        $region17: #{tpu_custom_call.1} parent=11 // pred_check
          %p298 = pneg %p102
        $region18: #{tpu_custom_call.1} parent=11 // pred_check_branch
          %300 = sbr.rel (%p298) target = $region20
        $region19: #{tpu_custom_call.1} parent=11 // pred_region
          _
        $region20: #{tpu_custom_call.1} parent=11 // pred_fallthru
          _
        // Predicated region
        $region21: #{tpu_custom_call.1} parent=11 // pred_check
          %p301 = pneg %p123
        $region22: #{tpu_custom_call.1} parent=11 // pred_check_branch
          %303 = sbr.rel (%p301) target = $region24
        $region23: #{tpu_custom_call.1} parent=11 // pred_region
          %s305 = ssub.s32 256, 256
          %306 = vsyncadd [#allocation5], %s305
          %s307 = sshll.u32 [#allocation6], 4
          %s308 = int_to_ptr.vmem [resolvable:$true] %s307
          %313 = dma.hbm_to_vmem [thread:$0]  %s3, 256, %s308, [#allocation5], 64, 64, 4
        $region24: #{tpu_custom_call.1} parent=11 // pred_fallthru
          _
        // Predicated region
        $region25: #{tpu_custom_call.1} parent=11 // pred_check
          %p314 = pneg %p144
        $region26: #{tpu_custom_call.1} parent=11 // pred_check_branch
          %316 = sbr.rel (%p314) target = $region28
        $region27: #{tpu_custom_call.1} parent=11 // pred_region
          _
        $region28: #{tpu_custom_call.1} parent=11 // pred_fallthru
          _
        // Predicated region
        $region29: #{tpu_custom_call.1} parent=11 // pred_check
          %p317 = pneg %p165
        $region30: #{tpu_custom_call.1} parent=11 // pred_check_branch
          %319 = sbr.rel (%p317) target = $region32
        $region31: #{tpu_custom_call.1} parent=11 // pred_region
          _
        $region32: #{tpu_custom_call.1} parent=11 // pred_fallthru
          _
        // Predicated region
        $region33: #{tpu_custom_call.1} parent=11 // pred_check
          %p320 = pneg %p186
        $region34: #{tpu_custom_call.1} parent=11 // pred_check_branch
          %322 = sbr.rel (%p320) target = $region36
        $region35: #{tpu_custom_call.1} parent=11 // pred_region
          _
        $region36: #{tpu_custom_call.1} parent=11 // pred_fallthru
          _
      $region12: #{tpu_custom_call.1} parent=5 // pred_fallthru
        _
      %p323 = scmp.lt.s32.totalorder %s20, 4
      // Predicated region
      $region37: #{tpu_custom_call.1} parent=5 // pred_check
        %p324 = pneg %p323
      $region38: #{tpu_custom_call.1} parent=5 // pred_check_branch
        %326 = sbr.rel (%p324) target = $region40
      $region39: #{tpu_custom_call.1} parent=5 // pred_region
        // Predicated region
        $region41: #{tpu_custom_call.1} parent=39 // pred_check
          %p327 = pneg %p54
        $region42: #{tpu_custom_call.1} parent=39 // pred_check_branch
          %329 = sbr.rel (%p327) target = $region44
        $region43: #{tpu_custom_call.1} parent=39 // pred_region
          %s330 = sand.u32 %s44, 1
          %s331 = scalar_lea.sflag [#allocation3], %s330
          %s332 = sand.u32 %s44, 1
          %s333 = smul.addr %s332, 4
          %s334 = scalar_lea.vmem [#allocation2], %s333
          %s336 = ssub.s32 64, 64
          %337 = vsyncadd %s331, %s336
          %s338 = smul.addr %s27, 2
          %s339 = sadd.s32 %s28, %s338
          %s340 = smul.addr %s339, 64
          %s341 = scalar_lea.hbm %s0, %s340
          %s343 = sshll.u32 %s334, 4
          %s344 = int_to_ptr.vmem [resolvable:$true] %s343
          %346 = dma.hbm_to_vmem [thread:$0]  %s341, 64, %s344, %s331
        $region44: #{tpu_custom_call.1} parent=39 // pred_fallthru
          _
      $region40: #{tpu_custom_call.1} parent=5 // pred_fallthru
        _
      %p347 = scmp.le.s32.totalorder 1, %s20
      %p348 = scmp.lt.s32.totalorder %s20, 5
      %p349 = pnand %p347, %p348
      %p350 = pneg %p349
      // Predicated region
      $region45: #{tpu_custom_call.1} parent=5 // pred_check
        _
      $region46: #{tpu_custom_call.1} parent=5 // pred_check_branch
        %352 = sbr.rel (%p349) target = $region48
      $region47: #{tpu_custom_call.1} parent=5 // pred_region
        %s353 = ssub.s32 %s20, 1
        %s354 = sand.u32 %s47, 1
        %s355 = scalar_lea.sflag [#allocation3], %s354
        %s356 = sand.u32 %s47, 1
        %s357 = smul.addr %s356, 4
        %s358 = scalar_lea.vmem [#allocation2], %s357
        // Predicated region
        $region49: #{tpu_custom_call.1} parent=47 // pred_check
          %p359 = pneg %p60
        $region50: #{tpu_custom_call.1} parent=47 // pred_check_branch
          %361 = sbr.rel (%p359) target = $region52
        $region51: #{tpu_custom_call.1} parent=47 // pred_region
          %362 = dma.done %s355, 64
        $region52: #{tpu_custom_call.1} parent=47 // pred_fallthru
          _
        // Predicated region
        $region53: #{tpu_custom_call.1} parent=47 // pred_check
          %p363 = pneg %p81
        $region54: #{tpu_custom_call.1} parent=47 // pred_check_branch
          %365 = sbr.rel (%p363) target = $region56
        $region55: #{tpu_custom_call.1} parent=47 // pred_region
          %366 = dma.done [#allocation5], 256
        $region56: #{tpu_custom_call.1} parent=47 // pred_fallthru
          _
        // Predicated region
        $region57: #{tpu_custom_call.1} parent=47 // pred_check
          %p367 = pneg %p123
        $region58: #{tpu_custom_call.1} parent=47 // pred_check_branch
          %369 = sbr.rel (%p367) target = $region60
        $region59: #{tpu_custom_call.1} parent=47 // pred_region
          %370 = dma.done [#allocation5], 256
        $region60: #{tpu_custom_call.1} parent=47 // pred_fallthru
          _
        %s371 = sand.u32 %s47, 1
        %s372 = scalar_lea.sflag [#allocation3], %s371
        %s373 = sand.u32 %s47, 1
        %s374 = smul.addr %s373, 4
        %s375 = scalar_lea.vmem [#allocation2], %s374
        %p376 = pneg %p60
        %p377 = pneg %p57
        %p378 = pneg %p81
        %p379 = pneg %p78
        %p380 = pneg %p102
        %p381 = pneg %p99
        %p382 = pneg %p123
        %p383 = pneg %p120
        %p384 = pneg %p144
        %p385 = pneg %p141
        %p386 = pneg %p165
        %p387 = pneg %p162
        %p388 = pneg %p186
        %p389 = pneg %p183
        %p390 = pneg %p214
        %p391 = pneg %p211
        %s392 = sand.u32 %s201, 1
        %s393 = sand.u32 %s201, 1
        %s394 = smul.addr %s393, 16
        %s395 = scalar_lea.vmem [#allocation7], %s394
        %p396 = pneg %p242
        %p397 = pneg %p239
        %s398 = sand.u32 %s229, 1
        %s399 = sand.u32 %s229, 1
        %s400 = smul.addr %s399, 16
        %s401 = scalar_lea.vmem [#allocation8], %s400
        %p402 = pneg %p270
        %p403 = pneg %p267
        %s404 = sand.u32 %s257, 1
        %s405 = sand.u32 %s257, 1
        %s406 = smul.addr %s405, 16
        %s407 = scalar_lea.vmem [#allocation9], %s406
        %v409 = vld [vmem:[%s358] sm:$0xf]
        %v410 = vld [vmem:[#allocation4] sm:$0xf]
        %v411 = vld [vmem:[#allocation4 + $0x4] sm:$0xf]
        %v412 = vld [vmem:[#allocation4 + $0x8] sm:$0xf]
        %v413 = vld [vmem:[#allocation4 + $0xc] sm:$0xf]
        %v414 = vld [vmem:[%s2] sm:$0x1]
        %v416 = vlaneseq
        %v417 = vshrl.u32 %v416, 7
        %v418 = vsub.s32 0, %v417
        %v419 = vrot.slane %v414, %v418
        %v425 = vunpack.c.l.b16 %v410
        %v426 = vunpack.c.l.b16 %v411
        %v427 = vunpack.c.l.b16 %v412
        %v428 = vunpack.c.l.b16 %v413
        %v429 = vpack.c.b16 %v426, %v425
        %v430 = vpack.c.b16 %v428, %v427
        %vm433 = vcmask 261120
        %v435 = vsel %vm433, %v409, 0
        %437 = vmatprep.subr.bf16.mxu0 0
        %438 = vmatpush1.bf16.msra.mxu0 %v429
        %439 = vmatprep.subr.bf16.mxu0 0
        %440 = vmatpush1.bf16.msra.mxu0 %v430
        %441 = vmatprep.subr.bf16.mxu0 0
        %442 = vmatpush1.bf16.msra.mxu0 0
        %443 = vmatprep.subr.bf16.mxu0 0
        %444 = vmatpush1.bf16.msra.mxu0 0
        %445 = vmatprep.subr.bf16.mxu0 0
        %446 = vmatpush1.bf16.msra.mxu0 0
        %447 = vmatprep.subr.bf16.mxu0 0
        %448 = vmatpush1.bf16.msra.mxu0 0
        %449 = vmatprep.subr.bf16.mxu0 0
        %450 = vmatpush1.bf16.msra.mxu0 0
        %451 = vmatprep.subr.bf16.mxu0 0
        %452 = vmatpush1.bf16.msra.mxu0 0
        %453 = vmatprep.subr.bf16.mxu0 0
        %454 = vmatpush1.bf16.msra.mxu0 0
        %455 = vmatprep.subr.bf16.mxu0 0
        %456 = vmatpush1.bf16.msra.mxu0 0
        %457 = vmatprep.subr.bf16.mxu0 0
        %458 = vmatpush1.bf16.msra.mxu0 0
        %459 = vmatprep.subr.bf16.mxu0 0
        %460 = vmatpush1.bf16.msra.mxu0 0
        %461 = vmatprep.subr.bf16.mxu0 0
        %462 = vmatpush1.bf16.msra.mxu0 0
        %463 = vmatprep.subr.bf16.mxu0 0
        %464 = vmatpush1.bf16.msra.mxu0 0
        %465 = vmatprep.subr.bf16.mxu0 0
        %466 = vmatpush1.bf16.msra.mxu0 0
        %467 = vmatprep.subr.bf16.mxu0 0
        %468 = vmatpush1.bf16.msra.mxu0 0
        %469 = vmatprep.mubr.bf16.mxu0 0
        %470 = vmatmul.mubr.bf16.gmra.mrb[0].mxu0 %v435
        %v471 = vpop.f32.mrb[0].mxu0
        %v472 = vadd.f32 %v419, %v471
        %v473 = vpop.f32.mrb[0].mxu0
        %v474 = vpop.f32.mrb[0].mxu0
        %v475 = vpop.f32.mrb[0].mxu0
        %476 = vdwg.mxu0
        %v477 = vmul.f32 %v472, 0.35355338
        %v478 = vld [vmem:[#allocation6] sm:$0xf]
        %v479 = vld [vmem:[#allocation6 + $0x4] sm:$0xf]
        %v480 = vld [vmem:[#allocation6 + $0x8] sm:$0xf]
        %v481 = vld [vmem:[#allocation6 + $0xc] sm:$0xf]
        %v482 = vld [vmem:[%s4] sm:$0x1]
        %v484 = vlaneseq
        %v485 = vshrl.u32 %v484, 7
        %v486 = vsub.s32 0, %v485
        %v487 = vrot.slane %v482, %v486
        %v493 = vunpack.c.l.b16 %v478
        %v494 = vunpack.c.l.b16 %v479
        %v495 = vunpack.c.l.b16 %v480
        %v496 = vunpack.c.l.b16 %v481
        %v497 = vpack.c.b16 %v494, %v493
        %v498 = vpack.c.b16 %v496, %v495
        %501 = vmatprep.subr.bf16.mxu0 0
        %502 = vmatpush1.bf16.msra.mxu0 %v497
        %503 = vmatprep.subr.bf16.mxu0 0
        %504 = vmatpush1.bf16.msra.mxu0 %v498
        %505 = vmatprep.subr.bf16.mxu0 0
        %506 = vmatpush1.bf16.msra.mxu0 0
        %507 = vmatprep.subr.bf16.mxu0 0
        %508 = vmatpush1.bf16.msra.mxu0 0
        %509 = vmatprep.subr.bf16.mxu0 0
        %510 = vmatpush1.bf16.msra.mxu0 0
        %511 = vmatprep.subr.bf16.mxu0 0
        %512 = vmatpush1.bf16.msra.mxu0 0
        %513 = vmatprep.subr.bf16.mxu0 0
        %514 = vmatpush1.bf16.msra.mxu0 0
        %515 = vmatprep.subr.bf16.mxu0 0
        %516 = vmatpush1.bf16.msra.mxu0 0
        %517 = vmatprep.subr.bf16.mxu0 0
        %518 = vmatpush1.bf16.msra.mxu0 0
        %519 = vmatprep.subr.bf16.mxu0 0
        %520 = vmatpush1.bf16.msra.mxu0 0
        %521 = vmatprep.subr.bf16.mxu0 0
        %522 = vmatpush1.bf16.msra.mxu0 0
        %523 = vmatprep.subr.bf16.mxu0 0
        %524 = vmatpush1.bf16.msra.mxu0 0
        %525 = vmatprep.subr.bf16.mxu0 0
        %526 = vmatpush1.bf16.msra.mxu0 0
        %527 = vmatprep.subr.bf16.mxu0 0
        %528 = vmatpush1.bf16.msra.mxu0 0
        %529 = vmatprep.subr.bf16.mxu0 0
        %530 = vmatpush1.bf16.msra.mxu0 0
        %531 = vmatprep.subr.bf16.mxu0 0
        %532 = vmatpush1.bf16.msra.mxu0 0
        %533 = vmatprep.mubr.bf16.mxu0 0
        %534 = vmatmul.mubr.bf16.gmra.mrb[0].mxu0 %v435
        %v535 = vpop.f32.mrb[0].mxu0
        %v536 = vadd.f32 %v487, %v535
        %v537 = vpop.f32.mrb[0].mxu0
        %v538 = vpop.f32.mrb[0].mxu0
        %v539 = vpop.f32.mrb[0].mxu0
        %540 = vdwg.mxu0
        %v541 = vld [vmem:[%s5] sm:$0xf]
        %v542 = vld [vmem:[%s5 + $0x4] sm:$0xf]
        %v543 = vld [vmem:[%s5 + $0x8] sm:$0xf]
        %v544 = vld [vmem:[%s5 + $0xc] sm:$0xf]
        %v545 = vld [vmem:[%s6] sm:$0x1]
        %v547 = vlaneseq
        %v548 = vshrl.u32 %v547, 7
        %v549 = vsub.s32 0, %v548
        %v550 = vrot.slane %v545, %v549
        %v556 = vunpack.c.l.b16 %v541
        %v557 = vunpack.c.l.b16 %v542
        %v558 = vunpack.c.l.b16 %v543
        %v559 = vunpack.c.l.b16 %v544
        %v560 = vpack.c.b16 %v557, %v556
        %v561 = vpack.c.b16 %v559, %v558
        %564 = vmatprep.subr.bf16.mxu0 0
        %565 = vmatpush1.bf16.msra.mxu0 %v560
        %566 = vmatprep.subr.bf16.mxu0 0
        %567 = vmatpush1.bf16.msra.mxu0 %v561
        %568 = vmatprep.subr.bf16.mxu0 0
        %569 = vmatpush1.bf16.msra.mxu0 0
        %570 = vmatprep.subr.bf16.mxu0 0
        %571 = vmatpush1.bf16.msra.mxu0 0
        %572 = vmatprep.subr.bf16.mxu0 0
        %573 = vmatpush1.bf16.msra.mxu0 0
        %574 = vmatprep.subr.bf16.mxu0 0
        %575 = vmatpush1.bf16.msra.mxu0 0
        %576 = vmatprep.subr.bf16.mxu0 0
        %577 = vmatpush1.bf16.msra.mxu0 0
        %578 = vmatprep.subr.bf16.mxu0 0
        %579 = vmatpush1.bf16.msra.mxu0 0
        %580 = vmatprep.subr.bf16.mxu0 0
        %581 = vmatpush1.bf16.msra.mxu0 0
        %582 = vmatprep.subr.bf16.mxu0 0
        %583 = vmatpush1.bf16.msra.mxu0 0
        %584 = vmatprep.subr.bf16.mxu0 0
        %585 = vmatpush1.bf16.msra.mxu0 0
        %586 = vmatprep.subr.bf16.mxu0 0
        %587 = vmatpush1.bf16.msra.mxu0 0
        %588 = vmatprep.subr.bf16.mxu0 0
        %589 = vmatpush1.bf16.msra.mxu0 0
        %590 = vmatprep.subr.bf16.mxu0 0
        %591 = vmatpush1.bf16.msra.mxu0 0
        %592 = vmatprep.subr.bf16.mxu0 0
        %593 = vmatpush1.bf16.msra.mxu0 0
        %594 = vmatprep.subr.bf16.mxu0 0
        %595 = vmatpush1.bf16.msra.mxu0 0
        %596 = vmatprep.mubr.bf16.mxu0 0
        %597 = vmatmul.mubr.bf16.gmra.mrb[0].mxu0 %v435
        %v598 = vpop.f32.mrb[0].mxu0
        %v599 = vadd.f32 %v550, %v598
        %v600 = vpop.f32.mrb[0].mxu0
        %v601 = vpop.f32.mrb[0].mxu0
        %v602 = vpop.f32.mrb[0].mxu0
        %603 = vdwg.mxu0
        %v604 = vpack.c.bf16 %v477, %v477
        %vm605 = vcmask 60416
        %606 = vst.msk [vmem:[%s395] sm:$0xf] %vm605, %v604
        %v607 = vpack.c.bf16 %v536, %v536
        %608 = vst.msk [vmem:[%s401] sm:$0xf] %vm605, %v607
        %v609 = vpack.c.bf16 %v599, %v599
        %610 = vst.msk [vmem:[%s407] sm:$0xf] %vm605, %v609
        %v612 = vunpack.c.l.b16 %v604
        %v613 = vpack.c.b16 %v612, %v612
        %614 = vrot.lane.b32.xlu0 %v613, 120
        %v615 = vpop.permute.xlu0 %614
        %s617 = scalar_lea.vmem %s395, 4 [#allocation7]
        %618 = vst.msk [vmem:[%s617] sm:$0xf] %vm605, %v615
        %v620 = vunpack.c.l.b16 %v607
        %v621 = vpack.c.b16 %v620, %v620
        %622 = vrot.lane.b32.xlu0 %v621, 120
        %v623 = vpop.permute.xlu0 %622
        %s625 = scalar_lea.vmem %s401, 4 [#allocation8]
        %626 = vst.msk [vmem:[%s625] sm:$0xf] %vm605, %v623
        %v628 = vunpack.c.l.b16 %v609
        %v629 = vpack.c.b16 %v628, %v628
        %630 = vrot.lane.b32.xlu0 %v629, 120
        %v631 = vpop.permute.xlu0 %630
        %s633 = scalar_lea.vmem %s407, 4 [#allocation9]
        %634 = vst.msk [vmem:[%s633] sm:$0xf] %vm605, %v631
        %635 = vrot.lane.b32.xlu0 %v613, 112
        %v636 = vpop.permute.xlu0 %635
        %s638 = scalar_lea.vmem %s395, 8 [#allocation7]
        %639 = vst.msk [vmem:[%s638] sm:$0xf] %vm605, %v636
        %640 = vrot.lane.b32.xlu0 %v621, 112
        %v641 = vpop.permute.xlu0 %640
        %s643 = scalar_lea.vmem %s401, 8 [#allocation8]
        %644 = vst.msk [vmem:[%s643] sm:$0xf] %vm605, %v641
        %645 = vrot.lane.b32.xlu0 %v629, 112
        %v646 = vpop.permute.xlu0 %645
        %s648 = scalar_lea.vmem %s407, 8 [#allocation9]
        %649 = vst.msk [vmem:[%s648] sm:$0xf] %vm605, %v646
        %650 = vrot.lane.b32.xlu0 %v613, 104
        %v651 = vpop.permute.xlu0 %650
        %s653 = scalar_lea.vmem %s395, 12 [#allocation7]
        %654 = vst.msk [vmem:[%s653] sm:$0xf] %vm605, %v651
        %655 = vrot.lane.b32.xlu0 %v621, 104
        %v656 = vpop.permute.xlu0 %655
        %s658 = scalar_lea.vmem %s401, 12 [#allocation8]
        %659 = vst.msk [vmem:[%s658] sm:$0xf] %vm605, %v656
        %660 = vrot.lane.b32.xlu0 %v629, 104
        %v661 = vpop.permute.xlu0 %660
        %s663 = scalar_lea.vmem %s407, 12 [#allocation9]
        %664 = vst.msk [vmem:[%s663] sm:$0xf] %vm605, %v661
        %s665 = sand.u32 %s201, 1
        %s666 = sand.u32 %s201, 1
        %s667 = smul.addr %s666, 16
        %s668 = scalar_lea.vmem [#allocation7], %s667
        %s669 = sand.u32 %s229, 1
        %s670 = sand.u32 %s229, 1
        %s671 = smul.addr %s670, 16
        %s672 = scalar_lea.vmem [#allocation8], %s671
        %s673 = sand.u32 %s257, 1
        %s674 = sand.u32 %s257, 1
        %s675 = smul.addr %s674, 16
        %s676 = scalar_lea.vmem [#allocation9], %s675
        // Predicated region
        $region61: #{tpu_custom_call.1} parent=47 // pred_check
          %p677 = pneg %p211
        $region62: #{tpu_custom_call.1} parent=47 // pred_check_branch
          %679 = sbr.rel (%p677) target = $region64
        $region63: #{tpu_custom_call.1} parent=47 // pred_region
          %s680 = smul.addr %s29, 8
          %s681 = sadd.s32 %s30, %s680
          %s682 = smul.addr %s681, 4
          %s683 = scalar_lea.vmem %s7, %s682
          // Predicated region
          $region65: #{tpu_custom_call.1} parent=63 // pred_check
            _
          $region66: #{tpu_custom_call.1} parent=63 // pred_check_branch
            %685 = sbr.rel (0) target = $region68
          $region67: #{tpu_custom_call.1} parent=63 // pred_region
            // Predicated region
            $region69: #{tpu_custom_call.1} parent=67 // pred_check
              _
            $region70: #{tpu_custom_call.1} parent=67 // pred_check_branch
              %687 = sbr.rel target = $region72
            $region71: #{tpu_custom_call.1} parent=67 // pred_region
              // Predicated region
              $region84: #{tpu_custom_call.1} parent=71 // pred_check
                _
              $region85: #{tpu_custom_call.1} parent=71 // pred_check_branch
                %708 = sbr.rel (0) target = $region87
              $region86: #{tpu_custom_call.1} parent=71 // pred_region
                loop: start=0, step=1, limit=1
                $region88: #{tpu_custom_call.1} parent=86 // loop_pre_header
                  _
                $region89: #{tpu_custom_call.1} parent=86 // loop_header
                  %s710 = sphi 0, %s714
                  %p711 = scmp.ge.s32.totalorder %s710, 1
                  %s715 = sphi %s668, %s668
                  %s716 = sphi %s683, %s683
                $region90: #{tpu_custom_call.1} parent=86 // loop_header_branch
                  %713 = sbr.rel (%p711) target = $region94
                $region91: #{tpu_custom_call.1} parent=86 // loop_body
                  _
                $region92: #{tpu_custom_call.1} parent=86 // loop_footer
                  %s714 = sadd.s32 1, %s710
                $region93: #{tpu_custom_call.1} parent=86 // loop_footer_branch
                  %709 = sbr.rel target = $region89
                $region94: #{tpu_custom_call.1} parent=86 // loop_exit
                  _
                loop: start=0, step=1, limit=1
                $region95: #{tpu_custom_call.1} parent=86 // loop_pre_header
                  _
                $region96: #{tpu_custom_call.1} parent=86 // loop_header
                  %s719 = sphi 0, %s723
                  %p720 = scmp.ge.s32.totalorder %s719, 1
                  %s724 = sphi %s668, %s668
                  %s725 = sphi %s683, %s683
                $region97: #{tpu_custom_call.1} parent=86 // loop_header_branch
                  %722 = sbr.rel (%p720) target = $region101
                $region98: #{tpu_custom_call.1} parent=86 // loop_body
                  %v726 = vld [vmem:[%s724] sm:$0xf]
                  %727 = vst [vmem:[%s725] sm:$0xf] %v726
                  %v728 = vld [vmem:[%s724 + $0x4] sm:$0xf]
                  %729 = vst [vmem:[%s725 + $0x8] sm:$0xf] %v728
                  %v730 = vld [vmem:[%s724 + $0x8] sm:$0xf]
                  %731 = vst [vmem:[%s725 + $0x10] sm:$0xf] %v730
                  %v732 = vld [vmem:[%s724 + $0xc] sm:$0xf]
                  %733 = vst [vmem:[%s725 + $0x18] sm:$0xf] %v732
                $region99: #{tpu_custom_call.1} parent=86 // loop_footer
                  %s723 = sadd.s32 1, %s719
                $region100: #{tpu_custom_call.1} parent=86 // loop_footer_branch
                  %718 = sbr.rel target = $region96
                $region101: #{tpu_custom_call.1} parent=86 // loop_exit
                  _
              $region87: #{tpu_custom_call.1} parent=71 // pred_fallthru
                _
            $region72: #{tpu_custom_call.1} parent=67 // pred_fallthru
              _
            // Predicated region
            $region73: #{tpu_custom_call.1} parent=67 // pred_check
              _
            $region74: #{tpu_custom_call.1} parent=67 // pred_check_branch
              %689 = sbr.rel (0) target = $region76
            $region75: #{tpu_custom_call.1} parent=67 // pred_region
              loop: start=0, step=1, limit=1
              $region77: #{tpu_custom_call.1} parent=75 // loop_pre_header
                _
              $region78: #{tpu_custom_call.1} parent=75 // loop_header
                %s692 = sphi 0, %s696
                %p693 = scmp.ge.s32.totalorder %s692, 1
                %s697 = sphi %s668, %s668
                %s698 = sphi %s683, %s683
              $region79: #{tpu_custom_call.1} parent=75 // loop_header_branch
                %695 = sbr.rel (%p693) target = $region83
              $region80: #{tpu_custom_call.1} parent=75 // loop_body
                %v699 = vld [vmem:[%s697] sm:$0xf]
                %700 = vst [vmem:[%s698] sm:$0xf] %v699
                %v701 = vld [vmem:[%s697 + $0x4] sm:$0xf]
                %702 = vst [vmem:[%s698 + $0x8] sm:$0xf] %v701
                %v703 = vld [vmem:[%s697 + $0x8] sm:$0xf]
                %704 = vst [vmem:[%s698 + $0x10] sm:$0xf] %v703
                %v705 = vld [vmem:[%s697 + $0xc] sm:$0xf]
                %706 = vst [vmem:[%s698 + $0x18] sm:$0xf] %v705
              $region81: #{tpu_custom_call.1} parent=75 // loop_footer
                %s696 = sadd.s32 1, %s692
              $region82: #{tpu_custom_call.1} parent=75 // loop_footer_branch
                %691 = sbr.rel target = $region78
              $region83: #{tpu_custom_call.1} parent=75 // loop_exit
                _
            $region76: #{tpu_custom_call.1} parent=67 // pred_fallthru
              _
          $region68: #{tpu_custom_call.1} parent=63 // pred_fallthru
            _
          %734 = vnop
        $region64: #{tpu_custom_call.1} parent=47 // pred_fallthru
          _
        // Predicated region
        $region102: #{tpu_custom_call.1} parent=47 // pred_check
          %p735 = pneg %p239
        $region103: #{tpu_custom_call.1} parent=47 // pred_check_branch
          %737 = sbr.rel (%p735) target = $region105
        $region104: #{tpu_custom_call.1} parent=47 // pred_region
          %s738 = smul.addr %s29, 8
          %s739 = sadd.s32 %s30, %s738
          %s740 = smul.addr %s739, 4
          %s741 = scalar_lea.vmem %s8, %s740
          // Predicated region
          $region106: #{tpu_custom_call.1} parent=104 // pred_check
            _
          $region107: #{tpu_custom_call.1} parent=104 // pred_check_branch
            %743 = sbr.rel (0) target = $region109
          $region108: #{tpu_custom_call.1} parent=104 // pred_region
            // Predicated region
            $region110: #{tpu_custom_call.1} parent=108 // pred_check
              _
            $region111: #{tpu_custom_call.1} parent=108 // pred_check_branch
              %745 = sbr.rel target = $region113
            $region112: #{tpu_custom_call.1} parent=108 // pred_region
              // Predicated region
              $region125: #{tpu_custom_call.1} parent=112 // pred_check
                _
              $region126: #{tpu_custom_call.1} parent=112 // pred_check_branch
                %766 = sbr.rel (0) target = $region128
              $region127: #{tpu_custom_call.1} parent=112 // pred_region
                loop: start=0, step=1, limit=1
                $region129: #{tpu_custom_call.1} parent=127 // loop_pre_header
                  _
                $region130: #{tpu_custom_call.1} parent=127 // loop_header
                  %s768 = sphi 0, %s772
                  %p769 = scmp.ge.s32.totalorder %s768, 1
                  %s773 = sphi %s672, %s672
                  %s774 = sphi %s741, %s741
                $region131: #{tpu_custom_call.1} parent=127 // loop_header_branch
                  %771 = sbr.rel (%p769) target = $region135
                $region132: #{tpu_custom_call.1} parent=127 // loop_body
                  _
                $region133: #{tpu_custom_call.1} parent=127 // loop_footer
                  %s772 = sadd.s32 1, %s768
                $region134: #{tpu_custom_call.1} parent=127 // loop_footer_branch
                  %767 = sbr.rel target = $region130
                $region135: #{tpu_custom_call.1} parent=127 // loop_exit
                  _
                loop: start=0, step=1, limit=1
                $region136: #{tpu_custom_call.1} parent=127 // loop_pre_header
                  _
                $region137: #{tpu_custom_call.1} parent=127 // loop_header
                  %s777 = sphi 0, %s781
                  %p778 = scmp.ge.s32.totalorder %s777, 1
                  %s782 = sphi %s672, %s672
                  %s783 = sphi %s741, %s741
                $region138: #{tpu_custom_call.1} parent=127 // loop_header_branch
                  %780 = sbr.rel (%p778) target = $region142
                $region139: #{tpu_custom_call.1} parent=127 // loop_body
                  %v784 = vld [vmem:[%s782] sm:$0xf]
                  %785 = vst [vmem:[%s783] sm:$0xf] %v784
                  %v786 = vld [vmem:[%s782 + $0x4] sm:$0xf]
                  %787 = vst [vmem:[%s783 + $0x8] sm:$0xf] %v786
                  %v788 = vld [vmem:[%s782 + $0x8] sm:$0xf]
                  %789 = vst [vmem:[%s783 + $0x10] sm:$0xf] %v788
                  %v790 = vld [vmem:[%s782 + $0xc] sm:$0xf]
                  %791 = vst [vmem:[%s783 + $0x18] sm:$0xf] %v790
                $region140: #{tpu_custom_call.1} parent=127 // loop_footer
                  %s781 = sadd.s32 1, %s777
                $region141: #{tpu_custom_call.1} parent=127 // loop_footer_branch
                  %776 = sbr.rel target = $region137
                $region142: #{tpu_custom_call.1} parent=127 // loop_exit
                  _
              $region128: #{tpu_custom_call.1} parent=112 // pred_fallthru
                _
            $region113: #{tpu_custom_call.1} parent=108 // pred_fallthru
              _
            // Predicated region
            $region114: #{tpu_custom_call.1} parent=108 // pred_check
              _
            $region115: #{tpu_custom_call.1} parent=108 // pred_check_branch
              %747 = sbr.rel (0) target = $region117
            $region116: #{tpu_custom_call.1} parent=108 // pred_region
              loop: start=0, step=1, limit=1
              $region118: #{tpu_custom_call.1} parent=116 // loop_pre_header
                _
              $region119: #{tpu_custom_call.1} parent=116 // loop_header
                %s750 = sphi 0, %s754
                %p751 = scmp.ge.s32.totalorder %s750, 1
                %s755 = sphi %s672, %s672
                %s756 = sphi %s741, %s741
              $region120: #{tpu_custom_call.1} parent=116 // loop_header_branch
                %753 = sbr.rel (%p751) target = $region124
              $region121: #{tpu_custom_call.1} parent=116 // loop_body
                %v757 = vld [vmem:[%s755] sm:$0xf]
                %758 = vst [vmem:[%s756] sm:$0xf] %v757
                %v759 = vld [vmem:[%s755 + $0x4] sm:$0xf]
                %760 = vst [vmem:[%s756 + $0x8] sm:$0xf] %v759
                %v761 = vld [vmem:[%s755 + $0x8] sm:$0xf]
                %762 = vst [vmem:[%s756 + $0x10] sm:$0xf] %v761
                %v763 = vld [vmem:[%s755 + $0xc] sm:$0xf]
                %764 = vst [vmem:[%s756 + $0x18] sm:$0xf] %v763
              $region122: #{tpu_custom_call.1} parent=116 // loop_footer
                %s754 = sadd.s32 1, %s750
              $region123: #{tpu_custom_call.1} parent=116 // loop_footer_branch
                %749 = sbr.rel target = $region119
              $region124: #{tpu_custom_call.1} parent=116 // loop_exit
                _
            $region117: #{tpu_custom_call.1} parent=108 // pred_fallthru
              _
          $region109: #{tpu_custom_call.1} parent=104 // pred_fallthru
            _
          %792 = vnop
        $region105: #{tpu_custom_call.1} parent=47 // pred_fallthru
          _
        // Predicated region
        $region143: #{tpu_custom_call.1} parent=47 // pred_check
          %p793 = pneg %p267
        $region144: #{tpu_custom_call.1} parent=47 // pred_check_branch
          %795 = sbr.rel (%p793) target = $region146
        $region145: #{tpu_custom_call.1} parent=47 // pred_region
          %s796 = smul.addr %s29, 8
          %s797 = sadd.s32 %s30, %s796
          %s798 = smul.addr %s797, 4
          %s799 = scalar_lea.vmem %s9, %s798
          // Predicated region
          $region147: #{tpu_custom_call.1} parent=145 // pred_check
            _
          $region148: #{tpu_custom_call.1} parent=145 // pred_check_branch
            %801 = sbr.rel (0) target = $region150
          $region149: #{tpu_custom_call.1} parent=145 // pred_region
            // Predicated region
            $region151: #{tpu_custom_call.1} parent=149 // pred_check
              _
            $region152: #{tpu_custom_call.1} parent=149 // pred_check_branch
              %803 = sbr.rel target = $region154
            $region153: #{tpu_custom_call.1} parent=149 // pred_region
              // Predicated region
              $region166: #{tpu_custom_call.1} parent=153 // pred_check
                _
              $region167: #{tpu_custom_call.1} parent=153 // pred_check_branch
                %824 = sbr.rel (0) target = $region169
              $region168: #{tpu_custom_call.1} parent=153 // pred_region
                loop: start=0, step=1, limit=1
                $region170: #{tpu_custom_call.1} parent=168 // loop_pre_header
                  _
                $region171: #{tpu_custom_call.1} parent=168 // loop_header
                  %s826 = sphi 0, %s830
                  %p827 = scmp.ge.s32.totalorder %s826, 1
                  %s831 = sphi %s676, %s676
                  %s832 = sphi %s799, %s799
                $region172: #{tpu_custom_call.1} parent=168 // loop_header_branch
                  %829 = sbr.rel (%p827) target = $region176
                $region173: #{tpu_custom_call.1} parent=168 // loop_body
                  _
                $region174: #{tpu_custom_call.1} parent=168 // loop_footer
                  %s830 = sadd.s32 1, %s826
                $region175: #{tpu_custom_call.1} parent=168 // loop_footer_branch
                  %825 = sbr.rel target = $region171
                $region176: #{tpu_custom_call.1} parent=168 // loop_exit
                  _
                loop: start=0, step=1, limit=1
                $region177: #{tpu_custom_call.1} parent=168 // loop_pre_header
                  _
                $region178: #{tpu_custom_call.1} parent=168 // loop_header
                  %s835 = sphi 0, %s839
                  %p836 = scmp.ge.s32.totalorder %s835, 1
                  %s840 = sphi %s676, %s676
                  %s841 = sphi %s799, %s799
                $region179: #{tpu_custom_call.1} parent=168 // loop_header_branch
                  %838 = sbr.rel (%p836) target = $region183
                $region180: #{tpu_custom_call.1} parent=168 // loop_body
                  %v842 = vld [vmem:[%s840] sm:$0xf]
                  %843 = vst [vmem:[%s841] sm:$0xf] %v842
                  %v844 = vld [vmem:[%s840 + $0x4] sm:$0xf]
                  %845 = vst [vmem:[%s841 + $0x8] sm:$0xf] %v844
                  %v846 = vld [vmem:[%s840 + $0x8] sm:$0xf]
                  %847 = vst [vmem:[%s841 + $0x10] sm:$0xf] %v846
                  %v848 = vld [vmem:[%s840 + $0xc] sm:$0xf]
                  %849 = vst [vmem:[%s841 + $0x18] sm:$0xf] %v848
                $region181: #{tpu_custom_call.1} parent=168 // loop_footer
                  %s839 = sadd.s32 1, %s835
                $region182: #{tpu_custom_call.1} parent=168 // loop_footer_branch
                  %834 = sbr.rel target = $region178
                $region183: #{tpu_custom_call.1} parent=168 // loop_exit
                  _
              $region169: #{tpu_custom_call.1} parent=153 // pred_fallthru
                _
            $region154: #{tpu_custom_call.1} parent=149 // pred_fallthru
              _
            // Predicated region
            $region155: #{tpu_custom_call.1} parent=149 // pred_check
              _
            $region156: #{tpu_custom_call.1} parent=149 // pred_check_branch
              %805 = sbr.rel (0) target = $region158
            $region157: #{tpu_custom_call.1} parent=149 // pred_region
              loop: start=0, step=1, limit=1
              $region159: #{tpu_custom_call.1} parent=157 // loop_pre_header
                _
              $region160: #{tpu_custom_call.1} parent=157 // loop_header
                %s808 = sphi 0, %s812
                %p809 = scmp.ge.s32.totalorder %s808, 1
                %s813 = sphi %s676, %s676
                %s814 = sphi %s799, %s799
              $region161: #{tpu_custom_call.1} parent=157 // loop_header_branch
                %811 = sbr.rel (%p809) target = $region165
              $region162: #{tpu_custom_call.1} parent=157 // loop_body
                %v815 = vld [vmem:[%s813] sm:$0xf]
                %816 = vst [vmem:[%s814] sm:$0xf] %v815
                %v817 = vld [vmem:[%s813 + $0x4] sm:$0xf]
                %818 = vst [vmem:[%s814 + $0x8] sm:$0xf] %v817
                %v819 = vld [vmem:[%s813 + $0x8] sm:$0xf]
                %820 = vst [vmem:[%s814 + $0x10] sm:$0xf] %v819
                %v821 = vld [vmem:[%s813 + $0xc] sm:$0xf]
                %822 = vst [vmem:[%s814 + $0x18] sm:$0xf] %v821
              $region163: #{tpu_custom_call.1} parent=157 // loop_footer
                %s812 = sadd.s32 1, %s808
              $region164: #{tpu_custom_call.1} parent=157 // loop_footer_branch
                %807 = sbr.rel target = $region160
              $region165: #{tpu_custom_call.1} parent=157 // loop_exit
                _
            $region158: #{tpu_custom_call.1} parent=149 // pred_fallthru
              _
          $region150: #{tpu_custom_call.1} parent=145 // pred_fallthru
            _
          %850 = vnop
        $region146: #{tpu_custom_call.1} parent=47 // pred_fallthru
          _
      $region48: #{tpu_custom_call.1} parent=5 // pred_fallthru
        _
      %p851 = scmp.le.s32.totalorder 2, %s20
      // Predicated region
      $region184: #{tpu_custom_call.1} parent=5 // pred_check
        %p852 = pneg %p851
      $region185: #{tpu_custom_call.1} parent=5 // pred_check_branch
        %854 = sbr.rel (%p852) target = $region187
      $region186: #{tpu_custom_call.1} parent=5 // pred_region
        %s855 = ssub.s32 %s20, 2
        // Predicated region
        $region188: #{tpu_custom_call.1} parent=186 // pred_check
          %p856 = pneg %p217
        $region189: #{tpu_custom_call.1} parent=186 // pred_check_branch
          %858 = sbr.rel (%p856) target = $region191
        $region190: #{tpu_custom_call.1} parent=186 // pred_region
          %s859 = sand.u32 %s202, 1
          %s860 = sand.u32 %s202, 1
          %s861 = smul.addr %s860, 16
          %s862 = scalar_lea.vmem [#allocation7], %s861
        $region191: #{tpu_custom_call.1} parent=186 // pred_fallthru
          _
        // Predicated region
        $region192: #{tpu_custom_call.1} parent=186 // pred_check
          %p863 = pneg %p245
        $region193: #{tpu_custom_call.1} parent=186 // pred_check_branch
          %865 = sbr.rel (%p863) target = $region195
        $region194: #{tpu_custom_call.1} parent=186 // pred_region
          %s866 = sand.u32 %s230, 1
          %s867 = sand.u32 %s230, 1
          %s868 = smul.addr %s867, 16
          %s869 = scalar_lea.vmem [#allocation8], %s868
        $region195: #{tpu_custom_call.1} parent=186 // pred_fallthru
          _
        // Predicated region
        $region196: #{tpu_custom_call.1} parent=186 // pred_check
          %p870 = pneg %p273
        $region197: #{tpu_custom_call.1} parent=186 // pred_check_branch
          %872 = sbr.rel (%p870) target = $region199
        $region198: #{tpu_custom_call.1} parent=186 // pred_region
          %s873 = sand.u32 %s258, 1
          %s874 = sand.u32 %s258, 1
          %s875 = smul.addr %s874, 16
          %s876 = scalar_lea.vmem [#allocation9], %s875
        $region199: #{tpu_custom_call.1} parent=186 // pred_fallthru
          _
      $region187: #{tpu_custom_call.1} parent=5 // pred_fallthru
        _
    $region6: #{tpu_custom_call.1} parent=1 // loop_footer
      %s24 = sadd.s32 1, %s20
    $region7: #{tpu_custom_call.1} parent=1 // loop_footer_branch
      %19 = sbr.rel target = $region3
    $region8: #{tpu_custom_call.1} parent=1 // loop_exit
      _
    %877 = vsyncpa [#allocation3], 1
    %s878 = scalar_lea.sflag [#allocation3], 1
    %879 = vsyncpa %s878, 1
    %880 = vsyncpa [#allocation5], 1

// kernel: tpu_custom_call.1
$region0: #{tpu_custom_call.1}
  #allocation0 [shape = 'u32[]', space=smem, size = 0x4, offset = 0x4, fixed_abs, tag = 'smem constant byte address 0x4 - core index']
  #allocation1 [shape = 'u32[144,128]{1,0:T(1,128)}', space=vmem, size = 0x12000, scoped, tag = 'internal scratch']
  %s0 = inlined_call_operand.hbm [shape: bf16[2,16,32], index: 0, kind: input, shape index: {}]
  %s1 = inlined_call_operand.hbm [shape: bf16[32,32], index: 1, kind: input, shape index: {}]
  %s2 = inlined_call_operand.vmem [shape: f32[1,32], index: 2, kind: input, shape index: {}]
  %s3 = inlined_call_operand.hbm [shape: bf16[32,32], index: 3, kind: input, shape index: {}]
  %s4 = inlined_call_operand.vmem [shape: f32[1,32], index: 4, kind: input, shape index: {}]
  %s5 = inlined_call_operand.vmem [shape: bf16[32,32], index: 5, kind: input, shape index: {}]
  %s6 = inlined_call_operand.vmem [shape: f32[1,32], index: 6, kind: input, shape index: {}]
  %s7 = inlined_call_operand.vmem [shape: bf16[2,4,16,8], index: 7, kind: output, shape index: {0}]
  %s8 = inlined_call_operand.vmem [shape: bf16[2,4,16,8], index: 8, kind: output, shape index: {1}]
  %s9 = inlined_call_operand.vmem [shape: bf16[2,4,16,8], index: 9, kind: output, shape index: {2}]
  %10 = xla_tuple %s7, %s8, %s9
  %s11 = sld [smem:[#allocation0]]
  $region200: #{tpu_custom_call.1} parent=0
    _
  %s13 = ssub.s32 1, %s11
  %s14 = scalar_select 0, %s13, %s11
  $region1: #{tpu_custom_call.1} parent=0
    #allocation2 [shape = 'u8[4096]{0}', space=vmem, size = 0x1000, scoped, tag = 'input window, operand 0']
    #allocation3 [shape = 's32[2]{0}', space=sflag, size = 0x8, scoped, tag = 'scoped memory for tpu_custom_call.1']
    #allocation4 [shape = 'u8[8192]{0}', space=vmem, size = 0x2000, scoped, tag = 'input window, operand 1, single buffered']
    #allocation5 [shape = 's32[1]{0}', space=sflag, size = 0x4, scoped, tag = 'scoped memory for tpu_custom_call.1']
    #allocation6 [shape = 'u8[8192]{0}', space=vmem, size = 0x2000, scoped, tag = 'input window, operand 3, single buffered']
    #allocation7 [shape = 'u8[16384]{0}', space=vmem, size = 0x4000, scoped, tag = 'output window, operand 0']
    #allocation8 [shape = 'u8[16384]{0}', space=vmem, size = 0x4000, scoped, tag = 'output window, operand 1']
    #allocation9 [shape = 'u8[16384]{0}', space=vmem, size = 0x4000, scoped, tag = 'output window, operand 2']
    %15 = vsyncpa [#allocation3], 0
    %s16 = scalar_lea.sflag [#allocation3], 1
    %17 = vsyncpa %s16, 0
    %18 = vsyncpa [#allocation5], 0
    loop: start=0, step=1, limit=6
    $region2: #{tpu_custom_call.1} parent=1 // loop_pre_header
      _
    $region3: #{tpu_custom_call.1} parent=1 // loop_header
      %s20 = sphi 0, %s24
      %p21 = scmp.ge.s32.totalorder %s20, 6
      %s27 = sphi 0, %s39
      %s28 = sphi 0, %s35
      %s29 = sphi 0, %s27
      %s30 = sphi 0, %s28
      %s31 = sphi 0, %s29
      %s32 = sphi 0, %s30
      %s44 = sphi 0, %s46
      %s47 = sphi 0, %s44
      %s48 = sphi 0, %s47
      %s64 = sphi 0, %s48
      %s68 = sphi 0, %s68
      %s70 = sphi 0, %s68
      %s71 = sphi 0, %s70
      %s85 = sphi 0, %s71
      %s89 = sphi 0, %s89
      %s91 = sphi 0, %s89
      %s92 = sphi 0, %s91
      %s106 = sphi 0, %s92
      %s110 = sphi 0, %s110
      %s112 = sphi 0, %s110
      %s113 = sphi 0, %s112
      %s127 = sphi 0, %s113
      %s131 = sphi 0, %s131
      %s133 = sphi 0, %s131
      %s134 = sphi 0, %s133
      %s148 = sphi 0, %s134
      %s152 = sphi 0, %s152
      %s154 = sphi 0, %s152
      %s155 = sphi 0, %s154
      %s169 = sphi 0, %s155
      %s173 = sphi 0, %s173
      %s175 = sphi 0, %s173
      %s176 = sphi 0, %s175
      %s190 = sphi 0, %s176
      %s198 = sphi 0, %s200
      %s201 = sphi 0, %s198
      %s202 = sphi 0, %s201
      %s218 = sphi 0, %s202
      %s226 = sphi 0, %s228
      %s229 = sphi 0, %s226
      %s230 = sphi 0, %s229
      %s246 = sphi 0, %s230
      %s254 = sphi 0, %s256
      %s257 = sphi 0, %s254
      %s258 = sphi 0, %s257
      %s274 = sphi 0, %s258
    $region4: #{tpu_custom_call.1} parent=1 // loop_header_branch
      %23 = sbr.rel (%p21) target = $region8
    $region5: #{tpu_custom_call.1} parent=1 // loop_body
      %s25 = ssub.s32 %s20, 1
      %s26 = ssub.s32 %s20, 2
      %s33 = sadd.s32 1, %s28
      %p34 = scmp.ge.s32.totalorder %s33, 2
      %s35 = scalar_select %p34, 0, %s33
      %s36 = sadd.s32 1, %s27
      %s37 = scalar_select %p34, %s36, %s27
      %p38 = scmp.ge.s32.totalorder %s37, 2
      %s39 = scalar_select %p38, 0, %s37
      %s40 = ssub.s32 %s27, %s39
      %s41 = ssub.s32 %s28, %s35
      %s42 = sor.u32 %s40, %s41
      %p43 = scmp.eq.s32.totalorder %s42, 0
      %s45 = sadd.s32 %s44, 1
      %s46 = scalar_select %p43, %s44, %s45
      %p49 = pneg %p43
      %p50 = scmp.eq.s32.totalorder %s20, 3
      %p51 = por %p49, %p50
      %p52 = scmp.ne.s32.totalorder %s44, %s47
      %p53 = scmp.eq.s32.totalorder %s20, 0
      %p54 = por %p52, %p53
      %p55 = scmp.ne.s32.totalorder %s44, %s47
      %p56 = scmp.eq.s32.totalorder %s25, 3
      %p57 = por %p55, %p56
      %p58 = scmp.ne.s32.totalorder %s47, %s48
      %p59 = scmp.eq.s32.totalorder %s25, 0
      %p60 = por %p58, %p59
      %p61 = scmp.ne.s32.totalorder %s47, %s48
      %p62 = scmp.eq.s32.totalorder %s26, 3
      %p63 = por %p61, %p62
      %p65 = scmp.ne.s32.totalorder %s48, %s64
      %p66 = scmp.eq.s32.totalorder %s26, 0
      %p67 = por %p65, %p66
      %s69 = sadd.s32 %s68, 1
      %p72 = scmp.eq.s32.totalorder %s20, 3
      %p73 = scmp.ne.s32.totalorder %s68, %s70
      %p74 = scmp.eq.s32.totalorder %s20, 0
      %p75 = por %p73, %p74
      %p76 = scmp.ne.s32.totalorder %s68, %s70
      %p77 = scmp.eq.s32.totalorder %s25, 3
      %p78 = por %p76, %p77
      %p79 = scmp.ne.s32.totalorder %s70, %s71
      %p80 = scmp.eq.s32.totalorder %s25, 0
      %p81 = por %p79, %p80
      %p82 = scmp.ne.s32.totalorder %s70, %s71
      %p83 = scmp.eq.s32.totalorder %s26, 3
      %p84 = por %p82, %p83
      %p86 = scmp.ne.s32.totalorder %s71, %s85
      %p87 = scmp.eq.s32.totalorder %s26, 0
      %p88 = por %p86, %p87
      %s90 = sadd.s32 %s89, 1
      %p93 = scmp.eq.s32.totalorder %s20, 3
      %p94 = scmp.ne.s32.totalorder %s89, %s91
      %p95 = scmp.eq.s32.totalorder %s20, 0
      %p96 = por %p94, %p95
      %p97 = scmp.ne.s32.totalorder %s89, %s91
      %p98 = scmp.eq.s32.totalorder %s25, 3
      %p99 = por %p97, %p98
      %p100 = scmp.ne.s32.totalorder %s91, %s92
      %p101 = scmp.eq.s32.totalorder %s25, 0
      %p102 = por %p100, %p101
      %p103 = scmp.ne.s32.totalorder %s91, %s92
      %p104 = scmp.eq.s32.totalorder %s26, 3
      %p105 = por %p103, %p104
      %p107 = scmp.ne.s32.totalorder %s92, %s106
      %p108 = scmp.eq.s32.totalorder %s26, 0
      %p109 = por %p107, %p108
      %s111 = sadd.s32 %s110, 1
      %p114 = scmp.eq.s32.totalorder %s20, 3
      %p115 = scmp.ne.s32.totalorder %s110, %s112
      %p116 = scmp.eq.s32.totalorder %s20, 0
      %p117 = por %p115, %p116
      %p118 = scmp.ne.s32.totalorder %s110, %s112
      %p119 = scmp.eq.s32.totalorder %s25, 3
      %p120 = por %p118, %p119
      %p121 = scmp.ne.s32.totalorder %s112, %s113
      %p122 = scmp.eq.s32.totalorder %s25, 0
      %p123 = por %p121, %p122
      %p124 = scmp.ne.s32.totalorder %s112, %s113
      %p125 = scmp.eq.s32.totalorder %s26, 3
      %p126 = por %p124, %p125
      %p128 = scmp.ne.s32.totalorder %s113, %s127
      %p129 = scmp.eq.s32.totalorder %s26, 0
      %p130 = por %p128, %p129
      %s132 = sadd.s32 %s131, 1
      %p135 = scmp.eq.s32.totalorder %s20, 3
      %p136 = scmp.ne.s32.totalorder %s131, %s133
      %p137 = scmp.eq.s32.totalorder %s20, 0
      %p138 = por %p136, %p137
      %p139 = scmp.ne.s32.totalorder %s131, %s133
      %p140 = scmp.eq.s32.totalorder %s25, 3
      %p141 = por %p139, %p140
      %p142 = scmp.ne.s32.totalorder %s133, %s134
      %p143 = scmp.eq.s32.totalorder %s25, 0
      %p144 = por %p142, %p143
      %p145 = scmp.ne.s32.totalorder %s133, %s134
      %p146 = scmp.eq.s32.totalorder %s26, 3
      %p147 = por %p145, %p146
      %p149 = scmp.ne.s32.totalorder %s134, %s148
      %p150 = scmp.eq.s32.totalorder %s26, 0
      %p151 = por %p149, %p150
      %s153 = sadd.s32 %s152, 1
      %p156 = scmp.eq.s32.totalorder %s20, 3
      %p157 = scmp.ne.s32.totalorder %s152, %s154
      %p158 = scmp.eq.s32.totalorder %s20, 0
      %p159 = por %p157, %p158
      %p160 = scmp.ne.s32.totalorder %s152, %s154
      %p161 = scmp.eq.s32.totalorder %s25, 3
      %p162 = por %p160, %p161
      %p163 = scmp.ne.s32.totalorder %s154, %s155
      %p164 = scmp.eq.s32.totalorder %s25, 0
      %p165 = por %p163, %p164
      %p166 = scmp.ne.s32.totalorder %s154, %s155
      %p167 = scmp.eq.s32.totalorder %s26, 3
      %p168 = por %p166, %p167
      %p170 = scmp.ne.s32.totalorder %s155, %s169
      %p171 = scmp.eq.s32.totalorder %s26, 0
      %p172 = por %p170, %p171
      %s174 = sadd.s32 %s173, 1
      %p177 = scmp.eq.s32.totalorder %s20, 3
      %p178 = scmp.ne.s32.totalorder %s173, %s175
      %p179 = scmp.eq.s32.totalorder %s20, 0
      %p180 = por %p178, %p179
      %p181 = scmp.ne.s32.totalorder %s173, %s175
      %p182 = scmp.eq.s32.totalorder %s25, 3
      %p183 = por %p181, %p182
      %p184 = scmp.ne.s32.totalorder %s175, %s176
      %p185 = scmp.eq.s32.totalorder %s25, 0
      %p186 = por %p184, %p185
      %p187 = scmp.ne.s32.totalorder %s175, %s176
      %p188 = scmp.eq.s32.totalorder %s26, 3
      %p189 = por %p187, %p188
      %p191 = scmp.ne.s32.totalorder %s176, %s190
      %p192 = scmp.eq.s32.totalorder %s26, 0
      %p193 = por %p191, %p192
      %s194 = ssub.s32 %s27, %s39
      %s195 = ssub.s32 %s28, %s35
      %s196 = sor.u32 %s194, %s195
      %p197 = scmp.eq.s32.totalorder %s196, 0
      %s199 = sadd.s32 %s198, 1
      %s200 = scalar_select %p197, %s198, %s199
      %p203 = pneg %p197
      %p204 = scmp.eq.s32.totalorder %s20, 3
      %p205 = por %p203, %p204
      %p206 = scmp.ne.s32.totalorder %s198, %s201
      %p207 = scmp.eq.s32.totalorder %s20, 0
      %p208 = por %p206, %p207
      %p209 = scmp.ne.s32.totalorder %s198, %s201
      %p210 = scmp.eq.s32.totalorder %s25, 3
      %p211 = por %p209, %p210
      %p212 = scmp.ne.s32.totalorder %s201, %s202
      %p213 = scmp.eq.s32.totalorder %s25, 0
      %p214 = por %p212, %p213
      %p215 = scmp.ne.s32.totalorder %s201, %s202
      %p216 = scmp.eq.s32.totalorder %s26, 3
      %p217 = por %p215, %p216
      %p219 = scmp.ne.s32.totalorder %s202, %s218
      %p220 = scmp.eq.s32.totalorder %s26, 0
      %p221 = por %p219, %p220
      %s222 = ssub.s32 %s27, %s39
      %s223 = ssub.s32 %s28, %s35
      %s224 = sor.u32 %s222, %s223
      %p225 = scmp.eq.s32.totalorder %s224, 0
      %s227 = sadd.s32 %s226, 1
      %s228 = scalar_select %p225, %s226, %s227
      %p231 = pneg %p225
      %p232 = scmp.eq.s32.totalorder %s20, 3
      %p233 = por %p231, %p232
      %p234 = scmp.ne.s32.totalorder %s226, %s229
      %p235 = scmp.eq.s32.totalorder %s20, 0
      %p236 = por %p234, %p235
      %p237 = scmp.ne.s32.totalorder %s226, %s229
      %p238 = scmp.eq.s32.totalorder %s25, 3
      %p239 = por %p237, %p238
      %p240 = scmp.ne.s32.totalorder %s229, %s230
      %p241 = scmp.eq.s32.totalorder %s25, 0
      %p242 = por %p240, %p241
      %p243 = scmp.ne.s32.totalorder %s229, %s230
      %p244 = scmp.eq.s32.totalorder %s26, 3
      %p245 = por %p243, %p244
      %p247 = scmp.ne.s32.totalorder %s230, %s246
      %p248 = scmp.eq.s32.totalorder %s26, 0
      %p249 = por %p247, %p248
      %s250 = ssub.s32 %s27, %s39
      %s251 = ssub.s32 %s28, %s35
      %s252 = sor.u32 %s250, %s251
      %p253 = scmp.eq.s32.totalorder %s252, 0
      %s255 = sadd.s32 %s254, 1
      %s256 = scalar_select %p253, %s254, %s255
      %p259 = pneg %p253
      %p260 = scmp.eq.s32.totalorder %s20, 3
      %p261 = por %p259, %p260
      %p262 = scmp.ne.s32.totalorder %s254, %s257
      %p263 = scmp.eq.s32.totalorder %s20, 0
      %p264 = por %p262, %p263
      %p265 = scmp.ne.s32.totalorder %s254, %s257
      %p266 = scmp.eq.s32.totalorder %s25, 3
      %p267 = por %p265, %p266
      %p268 = scmp.ne.s32.totalorder %s257, %s258
      %p269 = scmp.eq.s32.totalorder %s25, 0
      %p270 = por %p268, %p269
      %p271 = scmp.ne.s32.totalorder %s257, %s258
      %p272 = scmp.eq.s32.totalorder %s26, 3
      %p273 = por %p271, %p272
      %p275 = scmp.ne.s32.totalorder %s258, %s274
      %p276 = scmp.eq.s32.totalorder %s26, 0
      %p277 = por %p275, %p276
      %p278 = scmp.le.s32.totalorder 1, %s20
      %p279 = scmp.lt.s32.totalorder %s20, 5
      %p280 = pnand %p278, %p279
      %p281 = pneg %p280
      // Predicated region
      $region9: #{tpu_custom_call.1} parent=5 // pred_check
        _
      $region10: #{tpu_custom_call.1} parent=5 // pred_check_branch
        %283 = sbr.rel (%p280) target = $region12
      $region11: #{tpu_custom_call.1} parent=5 // pred_region
        %s284 = ssub.s32 %s20, 1
        // Predicated region
        $region13: #{tpu_custom_call.1} parent=11 // pred_check
          %p285 = pneg %p81
        $region14: #{tpu_custom_call.1} parent=11 // pred_check_branch
          %287 = sbr.rel (%p285) target = $region16
        $region15: #{tpu_custom_call.1} parent=11 // pred_region
          %s289 = ssub.s32 256, 256
          %290 = vsyncadd [#allocation5], %s289
          %s291 = sshll.u32 [#allocation4], 4
          %s292 = int_to_ptr.vmem [resolvable:$true] %s291
          %297 = dma.hbm_to_vmem [thread:$0]  %s1, 256, %s292, [#allocation5], 64, 64, 4
        $region16: #{tpu_custom_call.1} parent=11 // pred_fallthru
          _
        // Predicated region
        $region17: #{tpu_custom_call.1} parent=11 // pred_check
          %p298 = pneg %p102
        $region18: #{tpu_custom_call.1} parent=11 // pred_check_branch
          %300 = sbr.rel (%p298) target = $region20
        $region19: #{tpu_custom_call.1} parent=11 // pred_region
          _
        $region20: #{tpu_custom_call.1} parent=11 // pred_fallthru
          _
        // Predicated region
        $region21: #{tpu_custom_call.1} parent=11 // pred_check
          %p301 = pneg %p123
        $region22: #{tpu_custom_call.1} parent=11 // pred_check_branch
          %303 = sbr.rel (%p301) target = $region24
        $region23: #{tpu_custom_call.1} parent=11 // pred_region
          %s305 = ssub.s32 256, 256
          %306 = vsyncadd [#allocation5], %s305
          %s307 = sshll.u32 [#allocation6], 4
          %s308 = int_to_ptr.vmem [resolvable:$true] %s307
          %313 = dma.hbm_to_vmem [thread:$0]  %s3, 256, %s308, [#allocation5], 64, 64, 4
        $region24: #{tpu_custom_call.1} parent=11 // pred_fallthru
          _
        // Predicated region
        $region25: #{tpu_custom_call.1} parent=11 // pred_check
          %p314 = pneg %p144
        $region26: #{tpu_custom_call.1} parent=11 // pred_check_branch
          %316 = sbr.rel (%p314) target = $region28
        $region27: #{tpu_custom_call.1} parent=11 // pred_region
          _
        $region28: #{tpu_custom_call.1} parent=11 // pred_fallthru
          _
        // Predicated region
        $region29: #{tpu_custom_call.1} parent=11 // pred_check
          %p317 = pneg %p165
        $region30: #{tpu_custom_call.1} parent=11 // pred_check_branch
          %319 = sbr.rel (%p317) target = $region32
        $region31: #{tpu_custom_call.1} parent=11 // pred_region
          _
        $region32: #{tpu_custom_call.1} parent=11 // pred_fallthru
          _
        // Predicated region
        $region33: #{tpu_custom_call.1} parent=11 // pred_check
          %p320 = pneg %p186
        $region34: #{tpu_custom_call.1} parent=11 // pred_check_branch
          %322 = sbr.rel (%p320) target = $region36
        $region35: #{tpu_custom_call.1} parent=11 // pred_region
          _
        $region36: #{tpu_custom_call.1} parent=11 // pred_fallthru
          _
      $region12: #{tpu_custom_call.1} parent=5 // pred_fallthru
        _
      %p323 = scmp.lt.s32.totalorder %s20, 4
      // Predicated region
      $region37: #{tpu_custom_call.1} parent=5 // pred_check
        %p324 = pneg %p323
      $region38: #{tpu_custom_call.1} parent=5 // pred_check_branch
        %326 = sbr.rel (%p324) target = $region40
      $region39: #{tpu_custom_call.1} parent=5 // pred_region
        // Predicated region
        $region41: #{tpu_custom_call.1} parent=39 // pred_check
          %p327 = pneg %p54
        $region42: #{tpu_custom_call.1} parent=39 // pred_check_branch
          %329 = sbr.rel (%p327) target = $region44
        $region43: #{tpu_custom_call.1} parent=39 // pred_region
          %s330 = sand.u32 %s44, 1
          %s331 = scalar_lea.sflag [#allocation3], %s330
          %s332 = sand.u32 %s44, 1
          %s333 = smul.addr %s332, 4
          %s334 = scalar_lea.vmem [#allocation2], %s333
          %s336 = ssub.s32 64, 64
          %337 = vsyncadd %s331, %s336
          %s338 = smul.addr %s27, 2
          %s339 = sadd.s32 %s28, %s338
          %s340 = smul.addr %s339, 64
          %s341 = scalar_lea.hbm %s0, %s340
          %s343 = sshll.u32 %s334, 4
          %s344 = int_to_ptr.vmem [resolvable:$true] %s343
          %346 = dma.hbm_to_vmem [thread:$0]  %s341, 64, %s344, %s331
        $region44: #{tpu_custom_call.1} parent=39 // pred_fallthru
          _
      $region40: #{tpu_custom_call.1} parent=5 // pred_fallthru
        _
      %p347 = scmp.le.s32.totalorder 1, %s20
      %p348 = scmp.lt.s32.totalorder %s20, 5
      %p349 = pnand %p347, %p348
      %p350 = pneg %p349
      // Predicated region
      $region45: #{tpu_custom_call.1} parent=5 // pred_check
        _
      $region46: #{tpu_custom_call.1} parent=5 // pred_check_branch
        %352 = sbr.rel (%p349) target = $region48
      $region47: #{tpu_custom_call.1} parent=5 // pred_region
        %s353 = ssub.s32 %s20, 1
        %s354 = sand.u32 %s47, 1
        %s355 = scalar_lea.sflag [#allocation3], %s354
        %s356 = sand.u32 %s47, 1
        %s357 = smul.addr %s356, 4
        %s358 = scalar_lea.vmem [#allocation2], %s357
        // Predicated region
        $region49: #{tpu_custom_call.1} parent=47 // pred_check
          %p359 = pneg %p60
        $region50: #{tpu_custom_call.1} parent=47 // pred_check_branch
          %361 = sbr.rel (%p359) target = $region52
        $region51: #{tpu_custom_call.1} parent=47 // pred_region
          %362 = dma.done %s355, 64
        $region52: #{tpu_custom_call.1} parent=47 // pred_fallthru
          _
        // Predicated region
        $region53: #{tpu_custom_call.1} parent=47 // pred_check
          %p363 = pneg %p81
        $region54: #{tpu_custom_call.1} parent=47 // pred_check_branch
          %365 = sbr.rel (%p363) target = $region56
        $region55: #{tpu_custom_call.1} parent=47 // pred_region
          %366 = dma.done [#allocation5], 256
        $region56: #{tpu_custom_call.1} parent=47 // pred_fallthru
          _
        // Predicated region
        $region57: #{tpu_custom_call.1} parent=47 // pred_check
          %p367 = pneg %p123
        $region58: #{tpu_custom_call.1} parent=47 // pred_check_branch
          %369 = sbr.rel (%p367) target = $region60
        $region59: #{tpu_custom_call.1} parent=47 // pred_region
          %370 = dma.done [#allocation5], 256
        $region60: #{tpu_custom_call.1} parent=47 // pred_fallthru
          _
        %s371 = sand.u32 %s47, 1
        %s372 = scalar_lea.sflag [#allocation3], %s371
        %s373 = sand.u32 %s47, 1
        %s374 = smul.addr %s373, 4
        %s375 = scalar_lea.vmem [#allocation2], %s374
        %p376 = pneg %p60
        %p377 = pneg %p57
        %p378 = pneg %p81
        %p379 = pneg %p78
        %p380 = pneg %p102
        %p381 = pneg %p99
        %p382 = pneg %p123
        %p383 = pneg %p120
        %p384 = pneg %p144
        %p385 = pneg %p141
        %p386 = pneg %p165
        %p387 = pneg %p162
        %p388 = pneg %p186
        %p389 = pneg %p183
        %p390 = pneg %p214
        %p391 = pneg %p211
        %s392 = sand.u32 %s201, 1
        %s393 = sand.u32 %s201, 1
        %s394 = smul.addr %s393, 16
        %s395 = scalar_lea.vmem [#allocation7], %s394
        %p396 = pneg %p242
        %p397 = pneg %p239
        %s398 = sand.u32 %s229, 1
        %s399 = sand.u32 %s229, 1
        %s400 = smul.addr %s399, 16
        %s401 = scalar_lea.vmem [#allocation8], %s400
        %p402 = pneg %p270
        %p403 = pneg %p267
        %s404 = sand.u32 %s257, 1
        %s405 = sand.u32 %s257, 1
        %s406 = smul.addr %s405, 16
        %s407 = scalar_lea.vmem [#allocation9], %s406
        %v409 = vld [vmem:[%s358] sm:$0xf]
        %v410 = vld [vmem:[#allocation4] sm:$0xf]
        %v411 = vld [vmem:[#allocation4 + $0x4] sm:$0xf]
        %v412 = vld [vmem:[#allocation4 + $0x8] sm:$0xf]
        %v413 = vld [vmem:[#allocation4 + $0xc] sm:$0xf]
        %v414 = vld [vmem:[%s2] sm:$0x1]
        %v416 = vlaneseq
        %v417 = vshrl.u32 %v416, 7
        %v418 = vsub.s32 0, %v417
        %v419 = vrot.slane %v414, %v418
        %v425 = vunpack.c.l.b16 %v410
        %v426 = vunpack.c.l.b16 %v411
        %v427 = vunpack.c.l.b16 %v412
        %v428 = vunpack.c.l.b16 %v413
        %v429 = vpack.c.b16 %v426, %v425
        %v430 = vpack.c.b16 %v428, %v427
        %vm433 = vcmask 261120
        %v435 = vsel %vm433, %v409, 0
        %437 = vmatprep.subr.bf16.mxu0 0
        %438 = vmatpush1.bf16.msra.mxu0 %v429
        %439 = vmatprep.subr.bf16.mxu0 0
        %440 = vmatpush1.bf16.msra.mxu0 %v430
        %441 = vmatprep.subr.bf16.mxu0 0
        %442 = vmatpush1.bf16.msra.mxu0 0
        %443 = vmatprep.subr.bf16.mxu0 0
        %444 = vmatpush1.bf16.msra.mxu0 0
        %445 = vmatprep.subr.bf16.mxu0 0
        %446 = vmatpush1.bf16.msra.mxu0 0
        %447 = vmatprep.subr.bf16.mxu0 0
        %448 = vmatpush1.bf16.msra.mxu0 0
        %449 = vmatprep.subr.bf16.mxu0 0
        %450 = vmatpush1.bf16.msra.mxu0 0
        %451 = vmatprep.subr.bf16.mxu0 0
        %452 = vmatpush1.bf16.msra.mxu0 0
        %453 = vmatprep.subr.bf16.mxu0 0
        %454 = vmatpush1.bf16.msra.mxu0 0
        %455 = vmatprep.subr.bf16.mxu0 0
        %456 = vmatpush1.bf16.msra.mxu0 0
        %457 = vmatprep.subr.bf16.mxu0 0
        %458 = vmatpush1.bf16.msra.mxu0 0
        %459 = vmatprep.subr.bf16.mxu0 0
        %460 = vmatpush1.bf16.msra.mxu0 0
        %461 = vmatprep.subr.bf16.mxu0 0
        %462 = vmatpush1.bf16.msra.mxu0 0
        %463 = vmatprep.subr.bf16.mxu0 0
        %464 = vmatpush1.bf16.msra.mxu0 0
        %465 = vmatprep.subr.bf16.mxu0 0
        %466 = vmatpush1.bf16.msra.mxu0 0
        %467 = vmatprep.subr.bf16.mxu0 0
        %468 = vmatpush1.bf16.msra.mxu0 0
        %469 = vmatprep.mubr.bf16.mxu0 0
        %470 = vmatmul.mubr.bf16.gmra.mrb[0].mxu0 %v435
        %v471 = vpop.f32.mrb[0].mxu0
        %v472 = vadd.f32 %v419, %v471
        %v473 = vpop.f32.mrb[0].mxu0
        %v474 = vpop.f32.mrb[0].mxu0
        %v475 = vpop.f32.mrb[0].mxu0
        %476 = vdwg.mxu0
        %v477 = vmul.f32 %v472, 0.35355338
        %v478 = vld [vmem:[#allocation6] sm:$0xf]
        %v479 = vld [vmem:[#allocation6 + $0x4] sm:$0xf]
        %v480 = vld [vmem:[#allocation6 + $0x8] sm:$0xf]
        %v481 = vld [vmem:[#allocation6 + $0xc] sm:$0xf]
        %v482 = vld [vmem:[%s4] sm:$0x1]
        %v484 = vlaneseq
        %v485 = vshrl.u32 %v484, 7
        %v486 = vsub.s32 0, %v485
        %v487 = vrot.slane %v482, %v486
        %v493 = vunpack.c.l.b16 %v478
        %v494 = vunpack.c.l.b16 %v479
        %v495 = vunpack.c.l.b16 %v480
        %v496 = vunpack.c.l.b16 %v481
        %v497 = vpack.c.b16 %v494, %v493
        %v498 = vpack.c.b16 %v496, %v495
        %501 = vmatprep.subr.bf16.mxu0 0
        %502 = vmatpush1.bf16.msra.mxu0 %v497
        %503 = vmatprep.subr.bf16.mxu0 0
        %504 = vmatpush1.bf16.msra.mxu0 %v498
        %505 = vmatprep.subr.bf16.mxu0 0
        %506 = vmatpush1.bf16.msra.mxu0 0
        %507 = vmatprep.subr.bf16.mxu0 0
        %508 = vmatpush1.bf16.msra.mxu0 0
        %509 = vmatprep.subr.bf16.mxu0 0
        %510 = vmatpush1.bf16.msra.mxu0 0
        %511 = vmatprep.subr.bf16.mxu0 0
        %512 = vmatpush1.bf16.msra.mxu0 0
        %513 = vmatprep.subr.bf16.mxu0 0
        %514 = vmatpush1.bf16.msra.mxu0 0
        %515 = vmatprep.subr.bf16.mxu0 0
        %516 = vmatpush1.bf16.msra.mxu0 0
        %517 = vmatprep.subr.bf16.mxu0 0
        %518 = vmatpush1.bf16.msra.mxu0 0
        %519 = vmatprep.subr.bf16.mxu0 0
        %520 = vmatpush1.bf16.msra.mxu0 0
        %521 = vmatprep.subr.bf16.mxu0 0
        %522 = vmatpush1.bf16.msra.mxu0 0
        %523 = vmatprep.subr.bf16.mxu0 0
        %524 = vmatpush1.bf16.msra.mxu0 0
        %525 = vmatprep.subr.bf16.mxu0 0
        %526 = vmatpush1.bf16.msra.mxu0 0
        %527 = vmatprep.subr.bf16.mxu0 0
        %528 = vmatpush1.bf16.msra.mxu0 0
        %529 = vmatprep.subr.bf16.mxu0 0
        %530 = vmatpush1.bf16.msra.mxu0 0
        %531 = vmatprep.subr.bf16.mxu0 0
        %532 = vmatpush1.bf16.msra.mxu0 0
        %533 = vmatprep.mubr.bf16.mxu0 0
        %534 = vmatmul.mubr.bf16.gmra.mrb[0].mxu0 %v435
        %v535 = vpop.f32.mrb[0].mxu0
        %v536 = vadd.f32 %v487, %v535
        %v537 = vpop.f32.mrb[0].mxu0
        %v538 = vpop.f32.mrb[0].mxu0
        %v539 = vpop.f32.mrb[0].mxu0
        %540 = vdwg.mxu0
        %v541 = vld [vmem:[%s5] sm:$0xf]
        %v542 = vld [vmem:[%s5 + $0x4] sm:$0xf]
        %v543 = vld [vmem:[%s5 + $0x8] sm:$0xf]
        %v544 = vld [vmem:[%s5 + $0xc] sm:$0xf]
        %v545 = vld [vmem:[%s6] sm:$0x1]
        %v547 = vlaneseq
        %v548 = vshrl.u32 %v547, 7
        %v549 = vsub.s32 0, %v548
        %v550 = vrot.slane %v545, %v549
        %v556 = vunpack.c.l.b16 %v541
        %v557 = vunpack.c.l.b16 %v542
        %v558 = vunpack.c.l.b16 %v543
        %v559 = vunpack.c.l.b16 %v544
        %v560 = vpack.c.b16 %v557, %v556
        %v561 = vpack.c.b16 %v559, %v558
        %564 = vmatprep.subr.bf16.mxu0 0
        %565 = vmatpush1.bf16.msra.mxu0 %v560
        %566 = vmatprep.subr.bf16.mxu0 0
        %567 = vmatpush1.bf16.msra.mxu0 %v561
        %568 = vmatprep.subr.bf16.mxu0 0
        %569 = vmatpush1.bf16.msra.mxu0 0
        %570 = vmatprep.subr.bf16.mxu0 0
        %571 = vmatpush1.bf16.msra.mxu0 0
        %572 = vmatprep.subr.bf16.mxu0 0
        %573 = vmatpush1.bf16.msra.mxu0 0
        %574 = vmatprep.subr.bf16.mxu0 0
        %575 = vmatpush1.bf16.msra.mxu0 0
        %576 = vmatprep.subr.bf16.mxu0 0
        %577 = vmatpush1.bf16.msra.mxu0 0
        %578 = vmatprep.subr.bf16.mxu0 0
        %579 = vmatpush1.bf16.msra.mxu0 0
        %580 = vmatprep.subr.bf16.mxu0 0
        %581 = vmatpush1.bf16.msra.mxu0 0
        %582 = vmatprep.subr.bf16.mxu0 0
        %583 = vmatpush1.bf16.msra.mxu0 0
        %584 = vmatprep.subr.bf16.mxu0 0
        %585 = vmatpush1.bf16.msra.mxu0 0
        %586 = vmatprep.subr.bf16.mxu0 0
        %587 = vmatpush1.bf16.msra.mxu0 0
        %588 = vmatprep.subr.bf16.mxu0 0
        %589 = vmatpush1.bf16.msra.mxu0 0
        %590 = vmatprep.subr.bf16.mxu0 0
        %591 = vmatpush1.bf16.msra.mxu0 0
        %592 = vmatprep.subr.bf16.mxu0 0
        %593 = vmatpush1.bf16.msra.mxu0 0
        %594 = vmatprep.subr.bf16.mxu0 0
        %595 = vmatpush1.bf16.msra.mxu0 0
        %596 = vmatprep.mubr.bf16.mxu0 0
        %597 = vmatmul.mubr.bf16.gmra.mrb[0].mxu0 %v435
        %v598 = vpop.f32.mrb[0].mxu0
        %v599 = vadd.f32 %v550, %v598
        %v600 = vpop.f32.mrb[0].mxu0
        %v601 = vpop.f32.mrb[0].mxu0
        %v602 = vpop.f32.mrb[0].mxu0
        %603 = vdwg.mxu0
        %v604 = vpack.c.bf16 %v477, %v477
        %vm605 = vcmask 60416
        %606 = vst.msk [vmem:[%s395] sm:$0xf] %vm605, %v604
        %v607 = vpack.c.bf16 %v536, %v536
        %608 = vst.msk [vmem:[%s401] sm:$0xf] %vm605, %v607
        %v609 = vpack.c.bf16 %v599, %v599
        %610 = vst.msk [vmem:[%s407] sm:$0xf] %vm605, %v609
        %v612 = vunpack.c.l.b16 %v604
        %v613 = vpack.c.b16 %v612, %v612
        %614 = vrot.lane.b32.xlu0 %v613, 120
        %v615 = vpop.permute.xlu0 %614
        %s617 = scalar_lea.vmem %s395, 4 [#allocation7]
        %618 = vst.msk [vmem:[%s617] sm:$0xf] %vm605, %v615
        %v620 = vunpack.c.l.b16 %v607
        %v621 = vpack.c.b16 %v620, %v620
        %622 = vrot.lane.b32.xlu0 %v621, 120
        %v623 = vpop.permute.xlu0 %622
        %s625 = scalar_lea.vmem %s401, 4 [#allocation8]
        %626 = vst.msk [vmem:[%s625] sm:$0xf] %vm605, %v623
        %v628 = vunpack.c.l.b16 %v609
        %v629 = vpack.c.b16 %v628, %v628
        %630 = vrot.lane.b32.xlu0 %v629, 120
        %v631 = vpop.permute.xlu0 %630
        %s633 = scalar_lea.vmem %s407, 4 [#allocation9]
        %634 = vst.msk [vmem:[%s633] sm:$0xf] %vm605, %v631
        %635 = vrot.lane.b32.xlu0 %v613, 112
        %v636 = vpop.permute.xlu0 %635
        %s638 = scalar_lea.vmem %s395, 8 [#allocation7]
        %639 = vst.msk [vmem:[%s638] sm:$0xf] %vm605, %v636
        %640 = vrot.lane.b32.xlu0 %v621, 112
        %v641 = vpop.permute.xlu0 %640
        %s643 = scalar_lea.vmem %s401, 8 [#allocation8]
        %644 = vst.msk [vmem:[%s643] sm:$0xf] %vm605, %v641
        %645 = vrot.lane.b32.xlu0 %v629, 112
        %v646 = vpop.permute.xlu0 %645
        %s648 = scalar_lea.vmem %s407, 8 [#allocation9]
        %649 = vst.msk [vmem:[%s648] sm:$0xf] %vm605, %v646
        %650 = vrot.lane.b32.xlu0 %v613, 104
        %v651 = vpop.permute.xlu0 %650
        %s653 = scalar_lea.vmem %s395, 12 [#allocation7]
        %654 = vst.msk [vmem:[%s653] sm:$0xf] %vm605, %v651
        %655 = vrot.lane.b32.xlu0 %v621, 104
        %v656 = vpop.permute.xlu0 %655
        %s658 = scalar_lea.vmem %s401, 12 [#allocation8]
        %659 = vst.msk [vmem:[%s658] sm:$0xf] %vm605, %v656
        %660 = vrot.lane.b32.xlu0 %v629, 104
        %v661 = vpop.permute.xlu0 %660
        %s663 = scalar_lea.vmem %s407, 12 [#allocation9]
        %664 = vst.msk [vmem:[%s663] sm:$0xf] %vm605, %v661
        %s665 = sand.u32 %s201, 1
        %s666 = sand.u32 %s201, 1
        %s667 = smul.addr %s666, 16
        %s668 = scalar_lea.vmem [#allocation7], %s667
        %s669 = sand.u32 %s229, 1
        %s670 = sand.u32 %s229, 1
        %s671 = smul.addr %s670, 16
        %s672 = scalar_lea.vmem [#allocation8], %s671
        %s673 = sand.u32 %s257, 1
        %s674 = sand.u32 %s257, 1
        %s675 = smul.addr %s674, 16
        %s676 = scalar_lea.vmem [#allocation9], %s675
        // Predicated region
        $region61: #{tpu_custom_call.1} parent=47 // pred_check
          %p677 = pneg %p211
        $region62: #{tpu_custom_call.1} parent=47 // pred_check_branch
          %679 = sbr.rel (%p677) target = $region64
        $region63: #{tpu_custom_call.1} parent=47 // pred_region
          %s680 = smul.addr %s29, 8
          %s681 = sadd.s32 %s30, %s680
          %s682 = smul.addr %s681, 4
          %s683 = scalar_lea.vmem %s7, %s682
          // Predicated region
          $region65: #{tpu_custom_call.1} parent=63 // pred_check
            _
          $region66: #{tpu_custom_call.1} parent=63 // pred_check_branch
            %685 = sbr.rel (0) target = $region68
          $region67: #{tpu_custom_call.1} parent=63 // pred_region
            // Predicated region
            $region69: #{tpu_custom_call.1} parent=67 // pred_check
              _
            $region70: #{tpu_custom_call.1} parent=67 // pred_check_branch
              %687 = sbr.rel target = $region72
            $region71: #{tpu_custom_call.1} parent=67 // pred_region
              // Predicated region
              $region84: #{tpu_custom_call.1} parent=71 // pred_check
                _
              $region85: #{tpu_custom_call.1} parent=71 // pred_check_branch
                %708 = sbr.rel (0) target = $region87
              $region86: #{tpu_custom_call.1} parent=71 // pred_region
                loop: start=0, step=1, limit=1
                $region88: #{tpu_custom_call.1} parent=86 // loop_pre_header
                  _
                $region89: #{tpu_custom_call.1} parent=86 // loop_header
                  %s710 = sphi 0, %s714
                  %p711 = scmp.ge.s32.totalorder %s710, 1
                  %s715 = sphi %s668, %s668
                  %s716 = sphi %s683, %s683
                $region90: #{tpu_custom_call.1} parent=86 // loop_header_branch
                  %713 = sbr.rel (%p711) target = $region94
                $region91: #{tpu_custom_call.1} parent=86 // loop_body
                  _
                $region92: #{tpu_custom_call.1} parent=86 // loop_footer
                  %s714 = sadd.s32 1, %s710
                $region93: #{tpu_custom_call.1} parent=86 // loop_footer_branch
                  %709 = sbr.rel target = $region89
                $region94: #{tpu_custom_call.1} parent=86 // loop_exit
                  _
                loop: start=0, step=1, limit=1
                $region95: #{tpu_custom_call.1} parent=86 // loop_pre_header
                  _
                $region96: #{tpu_custom_call.1} parent=86 // loop_header
                  %s719 = sphi 0, %s723
                  %p720 = scmp.ge.s32.totalorder %s719, 1
                  %s724 = sphi %s668, %s668
                  %s725 = sphi %s683, %s683
                $region97: #{tpu_custom_call.1} parent=86 // loop_header_branch
                  %722 = sbr.rel (%p720) target = $region101
                $region98: #{tpu_custom_call.1} parent=86 // loop_body
                  %v726 = vld [vmem:[%s724] sm:$0xf]
                  %727 = vst [vmem:[%s725] sm:$0xf] %v726
                  %v728 = vld [vmem:[%s724 + $0x4] sm:$0xf]
                  %729 = vst [vmem:[%s725 + $0x8] sm:$0xf] %v728
                  %v730 = vld [vmem:[%s724 + $0x8] sm:$0xf]
                  %731 = vst [vmem:[%s725 + $0x10] sm:$0xf] %v730
                  %v732 = vld [vmem:[%s724 + $0xc] sm:$0xf]
                  %733 = vst [vmem:[%s725 + $0x18] sm:$0xf] %v732
                $region99: #{tpu_custom_call.1} parent=86 // loop_footer
                  %s723 = sadd.s32 1, %s719
                $region100: #{tpu_custom_call.1} parent=86 // loop_footer_branch
                  %718 = sbr.rel target = $region96
                $region101: #{tpu_custom_call.1} parent=86 // loop_exit
                  _
              $region87: #{tpu_custom_call.1} parent=71 // pred_fallthru
                _
            $region72: #{tpu_custom_call.1} parent=67 // pred_fallthru
              _
            // Predicated region
            $region73: #{tpu_custom_call.1} parent=67 // pred_check
              _
            $region74: #{tpu_custom_call.1} parent=67 // pred_check_branch
              %689 = sbr.rel (0) target = $region76
            $region75: #{tpu_custom_call.1} parent=67 // pred_region
              loop: start=0, step=1, limit=1
              $region77: #{tpu_custom_call.1} parent=75 // loop_pre_header
                _
              $region78: #{tpu_custom_call.1} parent=75 // loop_header
                %s692 = sphi 0, %s696
                %p693 = scmp.ge.s32.totalorder %s692, 1
                %s697 = sphi %s668, %s668
                %s698 = sphi %s683, %s683
              $region79: #{tpu_custom_call.1} parent=75 // loop_header_branch
                %695 = sbr.rel (%p693) target = $region83
              $region80: #{tpu_custom_call.1} parent=75 // loop_body
                %v699 = vld [vmem:[%s697] sm:$0xf]
                %700 = vst [vmem:[%s698] sm:$0xf] %v699
                %v701 = vld [vmem:[%s697 + $0x4] sm:$0xf]
                %702 = vst [vmem:[%s698 + $0x8] sm:$0xf] %v701
                %v703 = vld [vmem:[%s697 + $0x8] sm:$0xf]
                %704 = vst [vmem:[%s698 + $0x10] sm:$0xf] %v703
                %v705 = vld [vmem:[%s697 + $0xc] sm:$0xf]
                %706 = vst [vmem:[%s698 + $0x18] sm:$0xf] %v705
              $region81: #{tpu_custom_call.1} parent=75 // loop_footer
                %s696 = sadd.s32 1, %s692
              $region82: #{tpu_custom_call.1} parent=75 // loop_footer_branch
                %691 = sbr.rel target = $region78
              $region83: #{tpu_custom_call.1} parent=75 // loop_exit
                _
            $region76: #{tpu_custom_call.1} parent=67 // pred_fallthru
              _
          $region68: #{tpu_custom_call.1} parent=63 // pred_fallthru
            _
          %734 = vnop
        $region64: #{tpu_custom_call.1} parent=47 // pred_fallthru
          _
        // Predicated region
        $region102: #{tpu_custom_call.1} parent=47 // pred_check
          %p735 = pneg %p239
        $region103: #{tpu_custom_call.1} parent=47 // pred_check_branch
          %737 = sbr.rel (%p735) target = $region105
        $region104: #{tpu_custom_call.1} parent=47 // pred_region
          %s738 = smul.addr %s29, 8
          %s739 = sadd.s32 %s30, %s738
          %s740 = smul.addr %s739, 4
          %s741 = scalar_lea.vmem %s8, %s740
          // Predicated region
          $region106: #{tpu_custom_call.1} parent=104 // pred_check
            _
          $region107: #{tpu_custom_call.1} parent=104 // pred_check_branch
            %743 = sbr.rel (0) target = $region109
          $region108: #{tpu_custom_call.1} parent=104 // pred_region
            // Predicated region
            $region110: #{tpu_custom_call.1} parent=108 // pred_check
              _
            $region111: #{tpu_custom_call.1} parent=108 // pred_check_branch
              %745 = sbr.rel target = $region113
            $region112: #{tpu_custom_call.1} parent=108 // pred_region
              // Predicated region
              $region125: #{tpu_custom_call.1} parent=112 // pred_check
                _
              $region126: #{tpu_custom_call.1} parent=112 // pred_check_branch
                %766 = sbr.rel (0) target = $region128
              $region127: #{tpu_custom_call.1} parent=112 // pred_region
                loop: start=0, step=1, limit=1
                $region129: #{tpu_custom_call.1} parent=127 // loop_pre_header
                  _
                $region130: #{tpu_custom_call.1} parent=127 // loop_header
                  %s768 = sphi 0, %s772
                  %p769 = scmp.ge.s32.totalorder %s768, 1
                  %s773 = sphi %s672, %s672
                  %s774 = sphi %s741, %s741
                $region131: #{tpu_custom_call.1} parent=127 // loop_header_branch
                  %771 = sbr.rel (%p769) target = $region135
                $region132: #{tpu_custom_call.1} parent=127 // loop_body
                  _
                $region133: #{tpu_custom_call.1} parent=127 // loop_footer
                  %s772 = sadd.s32 1, %s768
                $region134: #{tpu_custom_call.1} parent=127 // loop_footer_branch
                  %767 = sbr.rel target = $region130
                $region135: #{tpu_custom_call.1} parent=127 // loop_exit
                  _
                loop: start=0, step=1, limit=1
                $region136: #{tpu_custom_call.1} parent=127 // loop_pre_header
                  _
                $region137: #{tpu_custom_call.1} parent=127 // loop_header
                  %s777 = sphi 0, %s781
                  %p778 = scmp.ge.s32.totalorder %s777, 1
                  %s782 = sphi %s672, %s672
                  %s783 = sphi %s741, %s741
                $region138: #{tpu_custom_call.1} parent=127 // loop_header_branch
                  %780 = sbr.rel (%p778) target = $region142
                $region139: #{tpu_custom_call.1} parent=127 // loop_body
                  %v784 = vld [vmem:[%s782] sm:$0xf]
                  %785 = vst [vmem:[%s783] sm:$0xf] %v784
                  %v786 = vld [vmem:[%s782 + $0x4] sm:$0xf]
                  %787 = vst [vmem:[%s783 + $0x8] sm:$0xf] %v786
                  %v788 = vld [vmem:[%s782 + $0x8] sm:$0xf]
                  %789 = vst [vmem:[%s783 + $0x10] sm:$0xf] %v788
                  %v790 = vld [vmem:[%s782 + $0xc] sm:$0xf]
                  %791 = vst [vmem:[%s783 + $0x18] sm:$0xf] %v790
                $region140: #{tpu_custom_call.1} parent=127 // loop_footer
                  %s781 = sadd.s32 1, %s777
                $region141: #{tpu_custom_call.1} parent=127 // loop_footer_branch
                  %776 = sbr.rel target = $region137
                $region142: #{tpu_custom_call.1} parent=127 // loop_exit
                  _
              $region128: #{tpu_custom_call.1} parent=112 // pred_fallthru
                _
            $region113: #{tpu_custom_call.1} parent=108 // pred_fallthru
              _
            // Predicated region
            $region114: #{tpu_custom_call.1} parent=108 // pred_check
              _
            $region115: #{tpu_custom_call.1} parent=108 // pred_check_branch
              %747 = sbr.rel (0) target = $region117
            $region116: #{tpu_custom_call.1} parent=108 // pred_region
              loop: start=0, step=1, limit=1
              $region118: #{tpu_custom_call.1} parent=116 // loop_pre_header
                _
              $region119: #{tpu_custom_call.1} parent=116 // loop_header
                %s750 = sphi 0, %s754
                %p751 = scmp.ge.s32.totalorder %s750, 1
                %s755 = sphi %s672, %s672
                %s756 = sphi %s741, %s741
              $region120: #{tpu_custom_call.1} parent=116 // loop_header_branch
                %753 = sbr.rel (%p751) target = $region124
              $region121: #{tpu_custom_call.1} parent=116 // loop_body
                %v757 = vld [vmem:[%s755] sm:$0xf]
                %758 = vst [vmem:[%s756] sm:$0xf] %v757
                %v759 = vld [vmem:[%s755 + $0x4] sm:$0xf]
                %760 = vst [vmem:[%s756 + $0x8] sm:$0xf] %v759
                %v761 = vld [vmem:[%s755 + $0x8] sm:$0xf]
                %762 = vst [vmem:[%s756 + $0x10] sm:$0xf] %v761
                %v763 = vld [vmem:[%s755 + $0xc] sm:$0xf]
                %764 = vst [vmem:[%s756 + $0x18] sm:$0xf] %v763
              $region122: #{tpu_custom_call.1} parent=116 // loop_footer
                %s754 = sadd.s32 1, %s750
              $region123: #{tpu_custom_call.1} parent=116 // loop_footer_branch
                %749 = sbr.rel target = $region119
              $region124: #{tpu_custom_call.1} parent=116 // loop_exit
                _
            $region117: #{tpu_custom_call.1} parent=108 // pred_fallthru
              _
          $region109: #{tpu_custom_call.1} parent=104 // pred_fallthru
            _
          %792 = vnop
        $region105: #{tpu_custom_call.1} parent=47 // pred_fallthru
          _
        // Predicated region
        $region143: #{tpu_custom_call.1} parent=47 // pred_check
          %p793 = pneg %p267
        $region144: #{tpu_custom_call.1} parent=47 // pred_check_branch
          %795 = sbr.rel (%p793) target = $region146
        $region145: #{tpu_custom_call.1} parent=47 // pred_region
          %s796 = smul.addr %s29, 8
          %s797 = sadd.s32 %s30, %s796
          %s798 = smul.addr %s797, 4
          %s799 = scalar_lea.vmem %s9, %s798
          // Predicated region
          $region147: #{tpu_custom_call.1} parent=145 // pred_check
            _
          $region148: #{tpu_custom_call.1} parent=145 // pred_check_branch
            %801 = sbr.rel (0) target = $region150
          $region149: #{tpu_custom_call.1} parent=145 // pred_region
            // Predicated region
            $region151: #{tpu_custom_call.1} parent=149 // pred_check
              _
            $region152: #{tpu_custom_call.1} parent=149 // pred_check_branch
              %803 = sbr.rel target = $region154
            $region153: #{tpu_custom_call.1} parent=149 // pred_region
              // Predicated region
              $region166: #{tpu_custom_call.1} parent=153 // pred_check
                _
              $region167: #{tpu_custom_call.1} parent=153 // pred_check_branch
                %824 = sbr.rel (0) target = $region169
              $region168: #{tpu_custom_call.1} parent=153 // pred_region
                loop: start=0, step=1, limit=1
                $region170: #{tpu_custom_call.1} parent=168 // loop_pre_header
                  _
                $region171: #{tpu_custom_call.1} parent=168 // loop_header
                  %s826 = sphi 0, %s830
                  %p827 = scmp.ge.s32.totalorder %s826, 1
                  %s831 = sphi %s676, %s676
                  %s832 = sphi %s799, %s799
                $region172: #{tpu_custom_call.1} parent=168 // loop_header_branch
                  %829 = sbr.rel (%p827) target = $region176
                $region173: #{tpu_custom_call.1} parent=168 // loop_body
                  _
                $region174: #{tpu_custom_call.1} parent=168 // loop_footer
                  %s830 = sadd.s32 1, %s826
                $region175: #{tpu_custom_call.1} parent=168 // loop_footer_branch
                  %825 = sbr.rel target = $region171
                $region176: #{tpu_custom_call.1} parent=168 // loop_exit
                  _
                loop: start=0, step=1, limit=1
                $region177: #{tpu_custom_call.1} parent=168 // loop_pre_header
                  _
                $region178: #{tpu_custom_call.1} parent=168 // loop_header
                  %s835 = sphi 0, %s839
                  %p836 = scmp.ge.s32.totalorder %s835, 1
                  %s840 = sphi %s676, %s676
                  %s841 = sphi %s799, %s799
                $region179: #{tpu_custom_call.1} parent=168 // loop_header_branch
                  %838 = sbr.rel (%p836) target = $region183
                $region180: #{tpu_custom_call.1} parent=168 // loop_body
                  %v842 = vld [vmem:[%s840] sm:$0xf]
                  %843 = vst [vmem:[%s841] sm:$0xf] %v842
                  %v844 = vld [vmem:[%s840 + $0x4] sm:$0xf]
                  %845 = vst [vmem:[%s841 + $0x8] sm:$0xf] %v844
                  %v846 = vld [vmem:[%s840 + $0x8] sm:$0xf]
                  %847 = vst [vmem:[%s841 + $0x10] sm:$0xf] %v846
                  %v848 = vld [vmem:[%s840 + $0xc] sm:$0xf]
                  %849 = vst [vmem:[%s841 + $0x18] sm:$0xf] %v848
                $region181: #{tpu_custom_call.1} parent=168 // loop_footer
                  %s839 = sadd.s32 1, %s835
                $region182: #{tpu_custom_call.1} parent=168 // loop_footer_branch
                  %834 = sbr.rel target = $region178
                $region183: #{tpu_custom_call.1} parent=168 // loop_exit
                  _
              $region169: #{tpu_custom_call.1} parent=153 // pred_fallthru
                _
            $region154: #{tpu_custom_call.1} parent=149 // pred_fallthru
              _
            // Predicated region
            $region155: #{tpu_custom_call.1} parent=149 // pred_check
              _
            $region156: #{tpu_custom_call.1} parent=149 // pred_check_branch
              %805 = sbr.rel (0) target = $region158
            $region157: #{tpu_custom_call.1} parent=149 // pred_region
              loop: start=0, step=1, limit=1
              $region159: #{tpu_custom_call.1} parent=157 // loop_pre_header
                _
              $region160: #{tpu_custom_call.1} parent=157 // loop_header
                %s808 = sphi 0, %s812
                %p809 = scmp.ge.s32.totalorder %s808, 1
                %s813 = sphi %s676, %s676
                %s814 = sphi %s799, %s799
              $region161: #{tpu_custom_call.1} parent=157 // loop_header_branch
                %811 = sbr.rel (%p809) target = $region165
              $region162: #{tpu_custom_call.1} parent=157 // loop_body
                %v815 = vld [vmem:[%s813] sm:$0xf]
                %816 = vst [vmem:[%s814] sm:$0xf] %v815
                %v817 = vld [vmem:[%s813 + $0x4] sm:$0xf]
                %818 = vst [vmem:[%s814 + $0x8] sm:$0xf] %v817
                %v819 = vld [vmem:[%s813 + $0x8] sm:$0xf]
                %820 = vst [vmem:[%s814 + $0x10] sm:$0xf] %v819
                %v821 = vld [vmem:[%s813 + $0xc] sm:$0xf]
                %822 = vst [vmem:[%s814 + $0x18] sm:$0xf] %v821
              $region163: #{tpu_custom_call.1} parent=157 // loop_footer
                %s812 = sadd.s32 1, %s808
              $region164: #{tpu_custom_call.1} parent=157 // loop_footer_branch
                %807 = sbr.rel target = $region160
              $region165: #{tpu_custom_call.1} parent=157 // loop_exit
                _
            $region158: #{tpu_custom_call.1} parent=149 // pred_fallthru
              _
          $region150: #{tpu_custom_call.1} parent=145 // pred_fallthru
            _
          %850 = vnop
        $region146: #{tpu_custom_call.1} parent=47 // pred_fallthru
          _
      $region48: #{tpu_custom_call.1} parent=5 // pred_fallthru
        _
      %p851 = scmp.le.s32.totalorder 2, %s20
      // Predicated region
      $region184: #{tpu_custom_call.1} parent=5 // pred_check
        %p852 = pneg %p851
      $region185: #{tpu_custom_call.1} parent=5 // pred_check_branch
        %854 = sbr.rel (%p852) target = $region187
      $region186: #{tpu_custom_call.1} parent=5 // pred_region
        %s855 = ssub.s32 %s20, 2
        // Predicated region
        $region188: #{tpu_custom_call.1} parent=186 // pred_check
          %p856 = pneg %p217
        $region189: #{tpu_custom_call.1} parent=186 // pred_check_branch
          %858 = sbr.rel (%p856) target = $region191
        $region190: #{tpu_custom_call.1} parent=186 // pred_region
          %s859 = sand.u32 %s202, 1
          %s860 = sand.u32 %s202, 1
          %s861 = smul.addr %s860, 16
          %s862 = scalar_lea.vmem [#allocation7], %s861
        $region191: #{tpu_custom_call.1} parent=186 // pred_fallthru
          _
        // Predicated region
        $region192: #{tpu_custom_call.1} parent=186 // pred_check
          %p863 = pneg %p245
        $region193: #{tpu_custom_call.1} parent=186 // pred_check_branch
          %865 = sbr.rel (%p863) target = $region195
        $region194: #{tpu_custom_call.1} parent=186 // pred_region
          %s866 = sand.u32 %s230, 1
          %s867 = sand.u32 %s230, 1
          %s868 = smul.addr %s867, 16
          %s869 = scalar_lea.vmem [#allocation8], %s868
        $region195: #{tpu_custom_call.1} parent=186 // pred_fallthru
          _
        // Predicated region
        $region196: #{tpu_custom_call.1} parent=186 // pred_check
          %p870 = pneg %p273
        $region197: #{tpu_custom_call.1} parent=186 // pred_check_branch
          %872 = sbr.rel (%p870) target = $region199
        $region198: #{tpu_custom_call.1} parent=186 // pred_region
          %s873 = sand.u32 %s258, 1
          %s874 = sand.u32 %s258, 1
          %s875 = smul.addr %s874, 16
          %s876 = scalar_lea.vmem [#allocation9], %s875
        $region199: #{tpu_custom_call.1} parent=186 // pred_fallthru
          _
      $region187: #{tpu_custom_call.1} parent=5 // pred_fallthru
        _
    $region6: #{tpu_custom_call.1} parent=1 // loop_footer
      %s24 = sadd.s32 1, %s20
    $region7: #{tpu_custom_call.1} parent=1 // loop_footer_branch
      %19 = sbr.rel target = $region3
    $region8: #{tpu_custom_call.1} parent=1 // loop_exit
      _
    %877 = vsyncpa [#allocation3], 1
    %s878 = scalar_lea.sflag [#allocation3], 1
    %879 = vsyncpa %s878, 1
    %880 = vsyncpa [#allocation5], 1

</llo_original>
